<compile_context>
chip_gen: v7x
topology: tpu7x:2x2x1
jax: 0.10.0
libtpu: 0.0.40
codegen_flags: <defaults>
</compile_context>

<pallas_src>
import jax
import jax.numpy as jnp
from jax.experimental import pallas as pl
from jax.experimental.pallas import tpu as pltpu

BN_EPS = 1e-5
LANE = 128


def _round_up(n, m):
    return ((n + m - 1) // m) * m


def _mm(x, w):
    # bf16 MXU inputs (weights already stored in bf16), f32 accumulation.
    return jnp.dot(x.astype(jnp.bfloat16), w, preferred_element_type=jnp.float32)


def _slab_layout(n1, hp, n3, n4, cp):
    """Layout of the packed per-feature-vector slab (name -> (offset, width)).
    Widths are all 128-multiples so every slice is a whole-vreg view."""
    order = [("g1", n1), ("be1", n1),
             ("g2", hp), ("be2", hp),
             ("b_rz", 2 * hp), ("b_in", hp), ("b_hn", hp),
             ("g3", n3), ("be3", n3),
             ("g4", n4), ("be4", n4),
             ("g5", cp), ("be5", cp),
             ("smax_mask", cp)]
    offs, o = {}, 0
    for name, w in order:
        offs[name] = (o, w)
        o += w
    return offs, o


def slip_detect_kernel(x_ref, h_ref, w1_ref, w2_ref, w_ih_ref, w_hh_ref,
                       w3_ref, w4_ref, w5_ref, slab_ref, out_ref, hout_ref):
    n1 = w1_ref.shape[1]
    hp = w2_ref.shape[1]
    n3 = w3_ref.shape[1]
    n4 = w4_ref.shape[1]
    cp = w5_ref.shape[1]
    offs, _ = _slab_layout(n1, hp, n3, n4, cp)

    def vec(name):
        o, w = offs[name]
        return slab_ref[:, o:o + w]          # static, 128-aligned slab slice

    def bn(v, gname, bname):
        # nn.BatchNorm1d training mode: biased batch statistics over axis 0.
        mean = jnp.mean(v, axis=0, keepdims=True)
        var = jnp.mean((v - mean) ** 2, axis=0, keepdims=True)
        return (v - mean) * jax.lax.rsqrt(var + BN_EPS) * vec(gname) + vec(bname)

    # ----- projector (Linear bias omitted: cancelled by training-mode BN) -----
    a = _mm(x_ref[...], w1_ref[...])                      # (B, 1024)
    a = jnp.maximum(bn(a, "g1", "be1"), 0.0)
    a = _mm(a, w2_ref[...])                               # (B, Hp)
    a = jnp.maximum(bn(a, "g2", "be2"), 0.0)

    # ----- GRU cell: fused gate matmuls, chunks (r, z, n), each Hp lanes -----
    h = h_ref[...]
    gi = _mm(a, w_ih_ref[...])                            # (B, 3Hp)
    gh = _mm(h, w_hh_ref[...])                            # (B, 3Hp)
    rz = jax.nn.sigmoid(gi[:, :2 * hp] + gh[:, :2 * hp] + vec("b_rz"))
    r = rz[:, :hp]
    z = rz[:, hp:]
    n = jnp.tanh(gi[:, 2 * hp:] + vec("b_in") + r * (gh[:, 2 * hp:] + vec("b_hn")))
    h_new = (1.0 - z) * n + z * h                          # padded lanes stay 0
    hout_ref[...] = h_new.astype(hout_ref.dtype)

    # ----- predictor -----
    y = _mm(h_new, w3_ref[...])
    y = jnp.maximum(bn(y, "g3", "be3"), 0.0)
    y = _mm(y, w4_ref[...])
    y = jnp.maximum(bn(y, "g4", "be4"), 0.0)
    y = bn(_mm(y, w5_ref[...]), "g5", "be5")

    # softmax over dim=1; padded category lanes masked with -1e30
    y = y + vec("smax_mask")
    y = y - jnp.max(y, axis=1, keepdims=True)
    e = jnp.exp(y)
    out_ref[...] = (e / jnp.sum(e, axis=1, keepdims=True)).astype(out_ref.dtype)


def slip_detect_global_gru(inp, h, kernel_params, hidden_dim, categories):
    """Whole forward pass in one gridless Pallas invocation (everything is a
    full-array VMEM block). Outputs come back 128-lane padded and are stripped
    here in the wrapper."""
    w1, w2, w_ih, w_hh, w3, w4, w5, slab = kernel_params
    B = inp.shape[0]
    H, C = hidden_dim, categories
    Hp, Cp = w2.shape[1], w5.shape[1]

    h_pad = jnp.pad(h.astype(jnp.float32), ((0, 0), (0, Hp - H)))
    args = (inp.astype(jnp.float32), h_pad, w1, w2, w_ih, w_hh, w3, w4, w5, slab)

    # VMEM budget: inputs + outputs + f32 intermediates. Gridless single-block
    # call -> no double-buffering multiplier; fixed headroom; well under every
    # generation's scoped default.
    io_bytes = sum(int(a.size) * a.dtype.itemsize for a in args)
    io_bytes += (B * Cp + B * Hp) * 4
    interm_bytes = B * (w1.shape[1] + 8 * Hp + 2 * w3.shape[1]
                        + 2 * w4.shape[1] + 2 * Cp) * 4
    vmem_limit = min(io_bytes + interm_bytes + (4 << 20), 32 << 20)

    vmem = pl.BlockSpec(memory_space=pltpu.MemorySpace.VMEM)
    out_pad, h_new_pad = pl.pallas_call(
        slip_detect_kernel,
        out_shape=(jax.ShapeDtypeStruct((B, Cp), jnp.float32),
                   jax.ShapeDtypeStruct((B, Hp), jnp.float32)),
        in_specs=[vmem] * len(args),
        out_specs=(vmem, vmem),
        compiler_params=pltpu.CompilerParams(vmem_limit_bytes=vmem_limit),
    )(*args)
    return out_pad[:, :C], h_new_pad[:, :H]


def init_params(key, input_dim, hidden_dim, categories):
    """Deterministic synthetic parameters with the module's logical shapes.
    Linear weights are stored transposed vs PyTorch ((fan_in, fan_out)) in
    bf16. Biases of Linears feeding training-mode BN are omitted (exact no-op).
    GRU gate weights/biases are stored concatenated in chunk order (r, z, n)."""
    keys = jax.random.split(key, 14)

    def lin_w(k, fin, fout):
        s = 1.0 / jnp.sqrt(jnp.float32(fin))
        return jax.random.uniform(k, (fin, fout), jnp.float32, -s, s).astype(jnp.bfloat16)

    def lin_b(k, fin, fout):
        s = 1.0 / jnp.sqrt(jnp.float32(fin))
        return jax.random.uniform(k, (1, fout), jnp.float32, -s, s)

    def bn(k, n):
        kg, kb = jax.random.split(k)
        return (1.0 + 0.1 * jax.random.normal(kg, (1, n), jnp.float32),
                0.1 * jax.random.normal(kb, (1, n), jnp.float32))

    H = hidden_dim
    p = {}
    p["w1"] = lin_w(keys[0], input_dim, 1024)
    p["g1"], p["be1"] = bn(keys[1], 1024)
    p["w2"] = lin_w(keys[2], 1024, H)
    p["g2"], p["be2"] = bn(keys[3], H)
    p["w_ih"] = lin_w(keys[4], H, 3 * H)
    p["b_ih"] = lin_b(keys[5], H, 3 * H)
    p["w_hh"] = lin_w(keys[6], H, 3 * H)
    p["b_hh"] = lin_b(keys[7], H, 3 * H)
    p["w3"] = lin_w(keys[8], H, 256)
    p["g3"], p["be3"] = bn(keys[9], 256)
    p["w4"] = lin_w(keys[10], 256, 128)
    p["g4"], p["be4"] = bn(keys[11], 128)
    p["w5"] = lin_w(keys[12], 128, categories)
    p["g5"], p["be5"] = bn(keys[13], categories)
    return p


def prepare_kernel_params(p, hidden_dim, categories):
    """Pad H and C feature dims to 128 lanes (zero padding, self-consistent
    through BN/ReLU/GRU), fold the GRU r/z biases, and pack all tiny (1,F)
    vectors + softmax mask into one f32 slab (one DMA)."""
    H, C = hidden_dim, categories
    Hp = _round_up(H, LANE)
    Cp = _round_up(C, LANE)

    def pad_lanes(a, width):
        return jnp.pad(a, ((0, 0), (0, width - a.shape[1])))

    def pad_rows(a, rows):
        return jnp.pad(a, ((0, rows - a.shape[0]), (0, 0)))

    def pad_gates(w):                       # (H, 3H) -> (Hp, 3Hp), per chunk
        chunks = [pad_lanes(w[:, i * H:(i + 1) * H], Hp) for i in range(3)]
        return pad_rows(jnp.concatenate(chunks, axis=1), Hp)

    def pad_gate_bias(b):                   # (1, 3H) -> three (1, Hp)
        return [pad_lanes(b[:, i * H:(i + 1) * H], Hp) for i in range(3)]

    w1 = p["w1"]
    w2 = pad_lanes(p["w2"], Hp)
    w_ih = pad_gates(p["w_ih"])
    w_hh = pad_gates(p["w_hh"])
    w3 = pad_rows(p["w3"], Hp)
    w4 = p["w4"]
    w5 = pad_lanes(p["w5"], Cp)

    b_ir, b_iz, b_in = pad_gate_bias(p["b_ih"])
    b_hr, b_hz, b_hn = pad_gate_bias(p["b_hh"])
    b_rz = jnp.concatenate([b_ir + b_hr, b_iz + b_hz], axis=1)     # (1, 2Hp)

    smax_mask = jnp.where(jnp.arange(Cp)[None, :] < C, 0.0, -1e30)
    smax_mask = smax_mask.astype(jnp.float32)

    vecs = {
        "g1": p["g1"], "be1": p["be1"],
        "g2": pad_lanes(p["g2"], Hp), "be2": pad_lanes(p["be2"], Hp),
        "b_rz": b_rz, "b_in": b_in, "b_hn": b_hn,
        "g3": p["g3"], "be3": p["be3"],
        "g4": p["g4"], "be4": p["be4"],
        "g5": pad_lanes(p["g5"], Cp), "be5": pad_lanes(p["be5"], Cp),
        "smax_mask": smax_mask,
    }
    layout, total = _slab_layout(w1.shape[1], Hp, w3.shape[1], w4.shape[1], Cp)
    ordered = sorted(layout.items(), key=lambda kv: kv[1][0])
    slab = jnp.concatenate([vecs[name].astype(jnp.float32) for name, _ in ordered],
                           axis=1)
    assert slab.shape == (1, total)
    return (w1, w2, w_ih, w_hh, w3, w4, w5, slab)


def reference_forward(inp, h, p):
    """Pure-JAX reference with the unpadded parameters (same bf16-weight /
    f32-accumulation math, exact divide)."""
    def bn(v, g, b):
        m = jnp.mean(v, axis=0, keepdims=True)
        var = jnp.mean((v - m) ** 2, axis=0, keepdims=True)
        return (v - m) * jax.lax.rsqrt(var + BN_EPS) * g + b

    H = h.shape[1]
    x = jnp.maximum(bn(_mm(inp, p["w1"]), p["g1"], p["be1"]), 0.0)
    x = jnp.maximum(bn(_mm(x, p["w2"]), p["g2"], p["be2"]), 0.0)

    gi = _mm(x, p["w_ih"]) + p["b_ih"]
    gh = _mm(h, p["w_hh"]) + p["b_hh"]
    r = jax.nn.sigmoid(gi[:, 0:H] + gh[:, 0:H])
    z = jax.nn.sigmoid(gi[:, H:2 * H] + gh[:, H:2 * H])
    n = jnp.tanh(gi[:, 2 * H:3 * H] + r * gh[:, 2 * H:3 * H])
    h_new = (1.0 - z) * n + z * h

    y = jnp.maximum(bn(_mm(h_new, p["w3"]), p["g3"], p["be3"]), 0.0)
    y = jnp.maximum(bn(_mm(y, p["w4"]), p["g4"], p["be4"]), 0.0)
    y = bn(_mm(y, p["w5"]), p["g5"], p["be5"])
    y = y - jnp.max(y, axis=1, keepdims=True)
    e = jnp.exp(y)
    return e / jnp.sum(e, axis=1, keepdims=True), h_new


if __name__ == "__main__":
    B, INPUT_DIM, HIDDEN, CATEGORIES = 2, 16, 32, 4

    key = jax.random.PRNGKey(0)
    k_inp, k_h, k_par = jax.random.split(key, 3)
    inp = jax.random.normal(k_inp, (B, INPUT_DIM), jnp.float32)
    h0 = jax.random.normal(k_h, (B, HIDDEN), jnp.float32)

    raw_params = init_params(k_par, INPUT_DIM, HIDDEN, CATEGORIES)
    kernel_params = prepare_kernel_params(raw_params, HIDDEN, CATEGORIES)

    out, h1 = slip_detect_global_gru(inp, h0, kernel_params, HIDDEN, CATEGORIES)
    out, h1 = jax.block_until_ready((out, h1))

    assert out.shape == (B, CATEGORIES) and h1.shape == (B, HIDDEN)
    assert bool(jnp.all(jnp.isfinite(out))) and bool(jnp.all(jnp.isfinite(h1)))
    # exact divide -> rows sum to 1 to f32 precision
    assert bool(jnp.allclose(jnp.sum(out, axis=1), 1.0, atol=1e-5))

    # cross-check against the pure-JAX reference (unpadded params, same math)
    ref_out, ref_h1 = reference_forward(inp, h0, raw_params)
    ref_out, ref_h1 = jax.block_until_ready((ref_out, ref_h1))
    assert bool(jnp.allclose(out, ref_out, atol=5e-3, rtol=5e-3))
    assert bool(jnp.allclose(h1, ref_h1, atol=5e-3, rtol=5e-3))

    print("KERNEL_OK")
</pallas_src>

<mosaic_0001>
module attributes {stable_mosaic.version = 11 : i64} {
  func.func @slip_detect_kernel(%arg0: memref<2x16xf32, #tpu.memory_space<vmem>>, %arg1: memref<2x128xf32, #tpu.memory_space<vmem>>, %arg2: memref<16x1024xbf16, #tpu.memory_space<vmem>>, %arg3: memref<1024x128xbf16, #tpu.memory_space<vmem>>, %arg4: memref<128x384xbf16, #tpu.memory_space<vmem>>, %arg5: memref<128x384xbf16, #tpu.memory_space<vmem>>, %arg6: memref<128x256xbf16, #tpu.memory_space<vmem>>, %arg7: memref<256x128xbf16, #tpu.memory_space<vmem>>, %arg8: memref<128x128xbf16, #tpu.memory_space<vmem>>, %arg9: memref<1x3968xf32, #tpu.memory_space<vmem>>, %arg10: memref<2x128xf32, #tpu.memory_space<vmem>>, %arg11: memref<2x128xf32, #tpu.memory_space<vmem>>) attributes {dimension_semantics = [], scalar_prefetch = 0 : i64, scratch_operands = 0 : i64, tpu.core_type = #tpu.core_type<tc>} {
    %c0 = arith.constant 0 : index
    %c0_0 = arith.constant 0 : index
    %0 = vector.load %arg0[%c0, %c0_0] : memref<2x16xf32, #tpu.memory_space<vmem>>, vector<2x16xf32>
    %c0_1 = arith.constant 0 : index
    %c0_2 = arith.constant 0 : index
    %1 = vector.load %arg2[%c0_1, %c0_2] : memref<16x1024xbf16, #tpu.memory_space<vmem>>, vector<16x1024xbf16>
    %2 = arith.truncf %0 : vector<2x16xf32> to vector<2x16xbf16>
    %cst = arith.constant dense<0.000000e+00> : vector<2x1024xf32>
    %3 = tpu.matmul %2, %1, %cst {dimension_numbers = #tpu.dot_dimension_numbers<[1], [0], [0], [1], [0, 0, 1, 1], [], []>} : vector<2x16xbf16>, vector<16x1024xbf16>, vector<2x1024xf32> -> vector<2x1024xf32>
    %cst_3 = arith.constant dense<0.000000e+00> : vector<1024xf32>
    %4 = vector.multi_reduction <add>, %3, %cst_3 [0] : vector<2x1024xf32> to vector<1024xf32>
    %5 = vector.shape_cast %4 : vector<1024xf32> to vector<1x1024xf32>
    %cst_4 = arith.constant 2.000000e+00 : f32
    %6 = vector.broadcast %cst_4 : f32 to vector<1x1024xf32>
    %7 = arith.divf %5, %6 : vector<1x1024xf32>
    %8 = vector.broadcast %7 : vector<1x1024xf32> to vector<2x1024xf32>
    %9 = arith.subf %3, %8 : vector<2x1024xf32>
    %10 = arith.mulf %9, %9 : vector<2x1024xf32>
    %cst_5 = arith.constant dense<0.000000e+00> : vector<1024xf32>
    %11 = vector.multi_reduction <add>, %10, %cst_5 [0] : vector<2x1024xf32> to vector<1024xf32>
    %12 = vector.shape_cast %11 : vector<1024xf32> to vector<1x1024xf32>
    %cst_6 = arith.constant 2.000000e+00 : f32
    %13 = vector.broadcast %cst_6 : f32 to vector<1x1024xf32>
    %14 = arith.divf %12, %13 : vector<1x1024xf32>
    %15 = vector.broadcast %7 : vector<1x1024xf32> to vector<2x1024xf32>
    %16 = arith.subf %3, %15 : vector<2x1024xf32>
    %cst_7 = arith.constant 9.99999974E-6 : f32
    %17 = vector.broadcast %cst_7 : f32 to vector<1x1024xf32>
    %18 = arith.addf %14, %17 : vector<1x1024xf32>
    %19 = math.rsqrt %18 : vector<1x1024xf32>
    %20 = vector.broadcast %19 : vector<1x1024xf32> to vector<2x1024xf32>
    %21 = arith.mulf %16, %20 : vector<2x1024xf32>
    %c0_8 = arith.constant 0 : index
    %c0_9 = arith.constant 0 : index
    %22 = vector.load %arg9[%c0_8, %c0_9] : memref<1x3968xf32, #tpu.memory_space<vmem>>, vector<1x1024xf32>
    %23 = vector.broadcast %22 : vector<1x1024xf32> to vector<2x1024xf32>
    %24 = arith.mulf %21, %23 : vector<2x1024xf32>
    %c0_10 = arith.constant 0 : index
    %c1024 = arith.constant 1024 : index
    %25 = vector.load %arg9[%c0_10, %c1024] : memref<1x3968xf32, #tpu.memory_space<vmem>>, vector<1x1024xf32>
    %26 = vector.broadcast %25 : vector<1x1024xf32> to vector<2x1024xf32>
    %27 = arith.addf %24, %26 : vector<2x1024xf32>
    %cst_11 = arith.constant 0.000000e+00 : f32
    %28 = vector.broadcast %cst_11 : f32 to vector<2x1024xf32>
    %29 = arith.maximumf %27, %28 : vector<2x1024xf32>
    %c0_12 = arith.constant 0 : index
    %c0_13 = arith.constant 0 : index
    %30 = vector.load %arg3[%c0_12, %c0_13] : memref<1024x128xbf16, #tpu.memory_space<vmem>>, vector<1024x128xbf16>
    %31 = arith.truncf %29 : vector<2x1024xf32> to vector<2x1024xbf16>
    %cst_14 = arith.constant dense<0.000000e+00> : vector<2x128xf32>
    %32 = tpu.matmul %31, %30, %cst_14 {dimension_numbers = #tpu.dot_dimension_numbers<[1], [0], [0], [1], [0, 0, 1, 1], [], []>} : vector<2x1024xbf16>, vector<1024x128xbf16>, vector<2x128xf32> -> vector<2x128xf32>
    %cst_15 = arith.constant dense<0.000000e+00> : vector<128xf32>
    %33 = vector.multi_reduction <add>, %32, %cst_15 [0] : vector<2x128xf32> to vector<128xf32>
    %34 = vector.shape_cast %33 : vector<128xf32> to vector<1x128xf32>
    %cst_16 = arith.constant 2.000000e+00 : f32
    %35 = vector.broadcast %cst_16 : f32 to vector<1x128xf32>
    %36 = arith.divf %34, %35 : vector<1x128xf32>
    %37 = vector.broadcast %36 : vector<1x128xf32> to vector<2x128xf32>
    %38 = arith.subf %32, %37 : vector<2x128xf32>
    %39 = arith.mulf %38, %38 : vector<2x128xf32>
    %cst_17 = arith.constant dense<0.000000e+00> : vector<128xf32>
    %40 = vector.multi_reduction <add>, %39, %cst_17 [0] : vector<2x128xf32> to vector<128xf32>
    %41 = vector.shape_cast %40 : vector<128xf32> to vector<1x128xf32>
    %cst_18 = arith.constant 2.000000e+00 : f32
    %42 = vector.broadcast %cst_18 : f32 to vector<1x128xf32>
    %43 = arith.divf %41, %42 : vector<1x128xf32>
    %44 = vector.broadcast %36 : vector<1x128xf32> to vector<2x128xf32>
    %45 = arith.subf %32, %44 : vector<2x128xf32>
    %cst_19 = arith.constant 9.99999974E-6 : f32
    %46 = vector.broadcast %cst_19 : f32 to vector<1x128xf32>
    %47 = arith.addf %43, %46 : vector<1x128xf32>
    %48 = math.rsqrt %47 : vector<1x128xf32>
    %49 = vector.broadcast %48 : vector<1x128xf32> to vector<2x128xf32>
    %50 = arith.mulf %45, %49 : vector<2x128xf32>
    %c0_20 = arith.constant 0 : index
    %c2048 = arith.constant 2048 : index
    %51 = vector.load %arg9[%c0_20, %c2048] : memref<1x3968xf32, #tpu.memory_space<vmem>>, vector<1x128xf32>
    %52 = vector.broadcast %51 : vector<1x128xf32> to vector<2x128xf32>
    %53 = arith.mulf %50, %52 : vector<2x128xf32>
    %c0_21 = arith.constant 0 : index
    %c2176 = arith.constant 2176 : index
    %54 = vector.load %arg9[%c0_21, %c2176] : memref<1x3968xf32, #tpu.memory_space<vmem>>, vector<1x128xf32>
    %55 = vector.broadcast %54 : vector<1x128xf32> to vector<2x128xf32>
    %56 = arith.addf %53, %55 : vector<2x128xf32>
    %cst_22 = arith.constant 0.000000e+00 : f32
    %57 = vector.broadcast %cst_22 : f32 to vector<2x128xf32>
    %58 = arith.maximumf %56, %57 : vector<2x128xf32>
    %c0_23 = arith.constant 0 : index
    %c0_24 = arith.constant 0 : index
    %59 = vector.load %arg1[%c0_23, %c0_24] : memref<2x128xf32, #tpu.memory_space<vmem>>, vector<2x128xf32>
    %c0_25 = arith.constant 0 : index
    %c0_26 = arith.constant 0 : index
    %60 = vector.load %arg4[%c0_25, %c0_26] : memref<128x384xbf16, #tpu.memory_space<vmem>>, vector<128x384xbf16>
    %61 = arith.truncf %58 : vector<2x128xf32> to vector<2x128xbf16>
    %cst_27 = arith.constant dense<0.000000e+00> : vector<2x384xf32>
    %62 = tpu.matmul %61, %60, %cst_27 {dimension_numbers = #tpu.dot_dimension_numbers<[1], [0], [0], [1], [0, 0, 1, 1], [], []>} : vector<2x128xbf16>, vector<128x384xbf16>, vector<2x384xf32> -> vector<2x384xf32>
    %c0_28 = arith.constant 0 : index
    %c0_29 = arith.constant 0 : index
    %63 = vector.load %arg5[%c0_28, %c0_29] : memref<128x384xbf16, #tpu.memory_space<vmem>>, vector<128x384xbf16>
    %64 = arith.truncf %59 : vector<2x128xf32> to vector<2x128xbf16>
    %cst_30 = arith.constant dense<0.000000e+00> : vector<2x384xf32>
    %65 = tpu.matmul %64, %63, %cst_30 {dimension_numbers = #tpu.dot_dimension_numbers<[1], [0], [0], [1], [0, 0, 1, 1], [], []>} : vector<2x128xbf16>, vector<128x384xbf16>, vector<2x384xf32> -> vector<2x384xf32>
    %66 = vector.extract_strided_slice %62 {offsets = [0, 0], sizes = [2, 256], strides = [1, 1]} : vector<2x384xf32> to vector<2x256xf32>
    %67 = vector.extract_strided_slice %65 {offsets = [0, 0], sizes = [2, 256], strides = [1, 1]} : vector<2x384xf32> to vector<2x256xf32>
    %68 = arith.addf %66, %67 : vector<2x256xf32>
    %c0_31 = arith.constant 0 : index
    %c2304 = arith.constant 2304 : index
    %69 = vector.load %arg9[%c0_31, %c2304] : memref<1x3968xf32, #tpu.memory_space<vmem>>, vector<1x256xf32>
    %70 = vector.broadcast %69 : vector<1x256xf32> to vector<2x256xf32>
    %71 = arith.addf %68, %70 : vector<2x256xf32>
    %72 = arith.negf %71 : vector<2x256xf32>
    %73 = math.exp %72 : vector<2x256xf32>
    %cst_32 = arith.constant 1.000000e+00 : f32
    %74 = vector.broadcast %cst_32 : f32 to vector<2x256xf32>
    %75 = arith.addf %74, %73 : vector<2x256xf32>
    %76 = arith.divf %74, %75 : vector<2x256xf32>
    %77 = vector.extract_strided_slice %76 {offsets = [0, 0], sizes = [2, 128], strides = [1, 1]} : vector<2x256xf32> to vector<2x128xf32>
    %78 = vector.extract_strided_slice %76 {offsets = [0, 128], sizes = [2, 128], strides = [1, 1]} : vector<2x256xf32> to vector<2x128xf32>
    %79 = vector.extract_strided_slice %62 {offsets = [0, 256], sizes = [2, 128], strides = [1, 1]} : vector<2x384xf32> to vector<2x128xf32>
    %c0_33 = arith.constant 0 : index
    %c2560 = arith.constant 2560 : index
    %80 = vector.load %arg9[%c0_33, %c2560] : memref<1x3968xf32, #tpu.memory_space<vmem>>, vector<1x128xf32>
    %81 = vector.broadcast %80 : vector<1x128xf32> to vector<2x128xf32>
    %82 = arith.addf %79, %81 : vector<2x128xf32>
    %83 = vector.extract_strided_slice %65 {offsets = [0, 256], sizes = [2, 128], strides = [1, 1]} : vector<2x384xf32> to vector<2x128xf32>
    %c0_34 = arith.constant 0 : index
    %c2688 = arith.constant 2688 : index
    %84 = vector.load %arg9[%c0_34, %c2688] : memref<1x3968xf32, #tpu.memory_space<vmem>>, vector<1x128xf32>
    %85 = vector.broadcast %84 : vector<1x128xf32> to vector<2x128xf32>
    %86 = arith.addf %83, %85 : vector<2x128xf32>
    %87 = arith.mulf %77, %86 : vector<2x128xf32>
    %88 = arith.addf %82, %87 : vector<2x128xf32>
    %89 = math.tanh %88 : vector<2x128xf32>
    %cst_35 = arith.constant 1.000000e+00 : f32
    %90 = vector.broadcast %cst_35 : f32 to vector<2x128xf32>
    %91 = arith.subf %90, %78 : vector<2x128xf32>
    %92 = arith.mulf %91, %89 : vector<2x128xf32>
    %93 = arith.mulf %78, %59 : vector<2x128xf32>
    %94 = arith.addf %92, %93 : vector<2x128xf32>
    %c0_36 = arith.constant 0 : index
    %c0_37 = arith.constant 0 : index
    %95 = vector.load %arg11[%c0_36, %c0_37] : memref<2x128xf32, #tpu.memory_space<vmem>>, vector<2x128xf32>
    tpu.vector_store %arg11[%c0_36, %c0_37], %94 {strides = array<i32>} : memref<2x128xf32, #tpu.memory_space<vmem>>, vector<2x128xf32>,
    %c0_38 = arith.constant 0 : index
    %c0_39 = arith.constant 0 : index
    %96 = vector.load %arg6[%c0_38, %c0_39] : memref<128x256xbf16, #tpu.memory_space<vmem>>, vector<128x256xbf16>
    %97 = arith.truncf %94 : vector<2x128xf32> to vector<2x128xbf16>
    %cst_40 = arith.constant dense<0.000000e+00> : vector<2x256xf32>
    %98 = tpu.matmul %97, %96, %cst_40 {dimension_numbers = #tpu.dot_dimension_numbers<[1], [0], [0], [1], [0, 0, 1, 1], [], []>} : vector<2x128xbf16>, vector<128x256xbf16>, vector<2x256xf32> -> vector<2x256xf32>
    %cst_41 = arith.constant dense<0.000000e+00> : vector<256xf32>
    %99 = vector.multi_reduction <add>, %98, %cst_41 [0] : vector<2x256xf32> to vector<256xf32>
    %100 = vector.shape_cast %99 : vector<256xf32> to vector<1x256xf32>
    %cst_42 = arith.constant 2.000000e+00 : f32
    %101 = vector.broadcast %cst_42 : f32 to vector<1x256xf32>
    %102 = arith.divf %100, %101 : vector<1x256xf32>
    %103 = vector.broadcast %102 : vector<1x256xf32> to vector<2x256xf32>
    %104 = arith.subf %98, %103 : vector<2x256xf32>
    %105 = arith.mulf %104, %104 : vector<2x256xf32>
    %cst_43 = arith.constant dense<0.000000e+00> : vector<256xf32>
    %106 = vector.multi_reduction <add>, %105, %cst_43 [0] : vector<2x256xf32> to vector<256xf32>
    %107 = vector.shape_cast %106 : vector<256xf32> to vector<1x256xf32>
    %cst_44 = arith.constant 2.000000e+00 : f32
    %108 = vector.broadcast %cst_44 : f32 to vector<1x256xf32>
    %109 = arith.divf %107, %108 : vector<1x256xf32>
    %110 = vector.broadcast %102 : vector<1x256xf32> to vector<2x256xf32>
    %111 = arith.subf %98, %110 : vector<2x256xf32>
    %cst_45 = arith.constant 9.99999974E-6 : f32
    %112 = vector.broadcast %cst_45 : f32 to vector<1x256xf32>
    %113 = arith.addf %109, %112 : vector<1x256xf32>
    %114 = math.rsqrt %113 : vector<1x256xf32>
    %115 = vector.broadcast %114 : vector<1x256xf32> to vector<2x256xf32>
    %116 = arith.mulf %111, %115 : vector<2x256xf32>
    %c0_46 = arith.constant 0 : index
    %c2816 = arith.constant 2816 : index
    %117 = vector.load %arg9[%c0_46, %c2816] : memref<1x3968xf32, #tpu.memory_space<vmem>>, vector<1x256xf32>
    %118 = vector.broadcast %117 : vector<1x256xf32> to vector<2x256xf32>
    %119 = arith.mulf %116, %118 : vector<2x256xf32>
    %c0_47 = arith.constant 0 : index
    %c3072 = arith.constant 3072 : index
    %120 = vector.load %arg9[%c0_47, %c3072] : memref<1x3968xf32, #tpu.memory_space<vmem>>, vector<1x256xf32>
    %121 = vector.broadcast %120 : vector<1x256xf32> to vector<2x256xf32>
    %122 = arith.addf %119, %121 : vector<2x256xf32>
    %cst_48 = arith.constant 0.000000e+00 : f32
    %123 = vector.broadcast %cst_48 : f32 to vector<2x256xf32>
    %124 = arith.maximumf %122, %123 : vector<2x256xf32>
    %c0_49 = arith.constant 0 : index
    %c0_50 = arith.constant 0 : index
    %125 = vector.load %arg7[%c0_49, %c0_50] : memref<256x128xbf16, #tpu.memory_space<vmem>>, vector<256x128xbf16>
    %126 = arith.truncf %124 : vector<2x256xf32> to vector<2x256xbf16>
    %cst_51 = arith.constant dense<0.000000e+00> : vector<2x128xf32>
    %127 = tpu.matmul %126, %125, %cst_51 {dimension_numbers = #tpu.dot_dimension_numbers<[1], [0], [0], [1], [0, 0, 1, 1], [], []>} : vector<2x256xbf16>, vector<256x128xbf16>, vector<2x128xf32> -> vector<2x128xf32>
    %cst_52 = arith.constant dense<0.000000e+00> : vector<128xf32>
    %128 = vector.multi_reduction <add>, %127, %cst_52 [0] : vector<2x128xf32> to vector<128xf32>
    %129 = vector.shape_cast %128 : vector<128xf32> to vector<1x128xf32>
    %cst_53 = arith.constant 2.000000e+00 : f32
    %130 = vector.broadcast %cst_53 : f32 to vector<1x128xf32>
    %131 = arith.divf %129, %130 : vector<1x128xf32>
    %132 = vector.broadcast %131 : vector<1x128xf32> to vector<2x128xf32>
    %133 = arith.subf %127, %132 : vector<2x128xf32>
    %134 = arith.mulf %133, %133 : vector<2x128xf32>
    %cst_54 = arith.constant dense<0.000000e+00> : vector<128xf32>
    %135 = vector.multi_reduction <add>, %134, %cst_54 [0] : vector<2x128xf32> to vector<128xf32>
    %136 = vector.shape_cast %135 : vector<128xf32> to vector<1x128xf32>
    %cst_55 = arith.constant 2.000000e+00 : f32
    %137 = vector.broadcast %cst_55 : f32 to vector<1x128xf32>
    %138 = arith.divf %136, %137 : vector<1x128xf32>
    %139 = vector.broadcast %131 : vector<1x128xf32> to vector<2x128xf32>
    %140 = arith.subf %127, %139 : vector<2x128xf32>
    %cst_56 = arith.constant 9.99999974E-6 : f32
    %141 = vector.broadcast %cst_56 : f32 to vector<1x128xf32>
    %142 = arith.addf %138, %141 : vector<1x128xf32>
    %143 = math.rsqrt %142 : vector<1x128xf32>
    %144 = vector.broadcast %143 : vector<1x128xf32> to vector<2x128xf32>
    %145 = arith.mulf %140, %144 : vector<2x128xf32>
    %c0_57 = arith.constant 0 : index
    %c3328 = arith.constant 3328 : index
    %146 = vector.load %arg9[%c0_57, %c3328] : memref<1x3968xf32, #tpu.memory_space<vmem>>, vector<1x128xf32>
    %147 = vector.broadcast %146 : vector<1x128xf32> to vector<2x128xf32>
    %148 = arith.mulf %145, %147 : vector<2x128xf32>
    %c0_58 = arith.constant 0 : index
    %c3456 = arith.constant 3456 : index
    %149 = vector.load %arg9[%c0_58, %c3456] : memref<1x3968xf32, #tpu.memory_space<vmem>>, vector<1x128xf32>
    %150 = vector.broadcast %149 : vector<1x128xf32> to vector<2x128xf32>
    %151 = arith.addf %148, %150 : vector<2x128xf32>
    %cst_59 = arith.constant 0.000000e+00 : f32
    %152 = vector.broadcast %cst_59 : f32 to vector<2x128xf32>
    %153 = arith.maximumf %151, %152 : vector<2x128xf32>
    %c0_60 = arith.constant 0 : index
    %c0_61 = arith.constant 0 : index
    %154 = vector.load %arg8[%c0_60, %c0_61] : memref<128x128xbf16, #tpu.memory_space<vmem>>, vector<128x128xbf16>
    %155 = arith.truncf %153 : vector<2x128xf32> to vector<2x128xbf16>
    %cst_62 = arith.constant dense<0.000000e+00> : vector<2x128xf32>
    %156 = tpu.matmul %155, %154, %cst_62 {dimension_numbers = #tpu.dot_dimension_numbers<[1], [0], [0], [1], [0, 0, 1, 1], [], []>} : vector<2x128xbf16>, vector<128x128xbf16>, vector<2x128xf32> -> vector<2x128xf32>
    %cst_63 = arith.constant dense<0.000000e+00> : vector<128xf32>
    %157 = vector.multi_reduction <add>, %156, %cst_63 [0] : vector<2x128xf32> to vector<128xf32>
    %158 = vector.shape_cast %157 : vector<128xf32> to vector<1x128xf32>
    %cst_64 = arith.constant 2.000000e+00 : f32
    %159 = vector.broadcast %cst_64 : f32 to vector<1x128xf32>
    %160 = arith.divf %158, %159 : vector<1x128xf32>
    %161 = vector.broadcast %160 : vector<1x128xf32> to vector<2x128xf32>
    %162 = arith.subf %156, %161 : vector<2x128xf32>
    %163 = arith.mulf %162, %162 : vector<2x128xf32>
    %cst_65 = arith.constant dense<0.000000e+00> : vector<128xf32>
    %164 = vector.multi_reduction <add>, %163, %cst_65 [0] : vector<2x128xf32> to vector<128xf32>
    %165 = vector.shape_cast %164 : vector<128xf32> to vector<1x128xf32>
    %cst_66 = arith.constant 2.000000e+00 : f32
    %166 = vector.broadcast %cst_66 : f32 to vector<1x128xf32>
    %167 = arith.divf %165, %166 : vector<1x128xf32>
    %168 = vector.broadcast %160 : vector<1x128xf32> to vector<2x128xf32>
    %169 = arith.subf %156, %168 : vector<2x128xf32>
    %cst_67 = arith.constant 9.99999974E-6 : f32
    %170 = vector.broadcast %cst_67 : f32 to vector<1x128xf32>
    %171 = arith.addf %167, %170 : vector<1x128xf32>
    %172 = math.rsqrt %171 : vector<1x128xf32>
    %173 = vector.broadcast %172 : vector<1x128xf32> to vector<2x128xf32>
    %174 = arith.mulf %169, %173 : vector<2x128xf32>
    %c0_68 = arith.constant 0 : index
    %c3584 = arith.constant 3584 : index
    %175 = vector.load %arg9[%c0_68, %c3584] : memref<1x3968xf32, #tpu.memory_space<vmem>>, vector<1x128xf32>
    %176 = vector.broadcast %175 : vector<1x128xf32> to vector<2x128xf32>
    %177 = arith.mulf %174, %176 : vector<2x128xf32>
    %c0_69 = arith.constant 0 : index
    %c3712 = arith.constant 3712 : index
    %178 = vector.load %arg9[%c0_69, %c3712] : memref<1x3968xf32, #tpu.memory_space<vmem>>, vector<1x128xf32>
    %179 = vector.broadcast %178 : vector<1x128xf32> to vector<2x128xf32>
    %180 = arith.addf %177, %179 : vector<2x128xf32>
    %c0_70 = arith.constant 0 : index
    %c3840 = arith.constant 3840 : index
    %181 = vector.load %arg9[%c0_70, %c3840] : memref<1x3968xf32, #tpu.memory_space<vmem>>, vector<1x128xf32>
    %182 = vector.broadcast %181 : vector<1x128xf32> to vector<2x128xf32>
    %183 = arith.addf %180, %182 : vector<2x128xf32>
    %cst_71 = arith.constant dense<0xFF800000> : vector<2xf32>
    %184 = vector.multi_reduction <maximumf>, %183, %cst_71 [1] : vector<2x128xf32> to vector<2xf32>
    %185 = vector.shape_cast %184 : vector<2xf32> to vector<2x1xf32>
    %186 = vector.broadcast %185 : vector<2x1xf32> to vector<2x128xf32>
    %187 = arith.subf %183, %186 : vector<2x128xf32>
    %188 = math.exp %187 : vector<2x128xf32>
    %cst_72 = arith.constant dense<0.000000e+00> : vector<2xf32>
    %189 = vector.multi_reduction <add>, %188, %cst_72 [1] : vector<2x128xf32> to vector<2xf32>
    %190 = vector.shape_cast %189 : vector<2xf32> to vector<2x1xf32>
    %191 = vector.broadcast %190 : vector<2x1xf32> to vector<2x128xf32>
    %192 = arith.divf %188, %191 : vector<2x128xf32>
    %c0_73 = arith.constant 0 : index
    %c0_74 = arith.constant 0 : index
    %193 = vector.load %arg10[%c0_73, %c0_74] : memref<2x128xf32, #tpu.memory_space<vmem>>, vector<2x128xf32>
    tpu.vector_store %arg10[%c0_73, %c0_74], %192 {strides = array<i32>} : memref<2x128xf32, #tpu.memory_space<vmem>>, vector<2x128xf32>,
    return
  }
}

</mosaic_0001>

<llo_original>
// kernel: tpu_custom_call.1
$region0: #{tpu_custom_call.1}
  #allocation0 [shape = 'u32[]', space=smem, size = 0x4, offset = 0x4, fixed_abs, tag = 'smem constant byte address 0x4 - core index']
  #allocation1 [shape = 'u32[144,128]{1,0:T(1,128)}', space=vmem, size = 0x12000, scoped, tag = 'internal scratch']
  %s0 = inlined_call_operand.hbm [shape: f32[2,16], index: 0, kind: input, shape index: {}]
  %s1 = inlined_call_operand.vmem [shape: f32[2,128], index: 1, kind: input, shape index: {}]
  %s2 = inlined_call_operand.hbm [shape: bf16[16,1024], index: 2, kind: input, shape index: {}]
  %s3 = inlined_call_operand.hbm [shape: bf16[1024,128], index: 3, kind: input, shape index: {}]
  %s4 = inlined_call_operand.hbm [shape: bf16[128,384], index: 4, kind: input, shape index: {}]
  %s5 = inlined_call_operand.hbm [shape: bf16[128,384], index: 5, kind: input, shape index: {}]
  %s6 = inlined_call_operand.hbm [shape: bf16[128,256], index: 6, kind: input, shape index: {}]
  %s7 = inlined_call_operand.hbm [shape: bf16[256,128], index: 7, kind: input, shape index: {}]
  %s8 = inlined_call_operand.hbm [shape: bf16[128,128], index: 8, kind: input, shape index: {}]
  %s9 = inlined_call_operand.vmem [shape: f32[1,3968], index: 9, kind: input, shape index: {}]
  %s10 = inlined_call_operand.hbm [shape: f32[2,128], index: 10, kind: output, shape index: {0}]
  %s11 = inlined_call_operand.hbm [shape: f32[2,128], index: 11, kind: output, shape index: {1}]
  %12 = xla_tuple %s10, %s11
  %s13 = sld [smem:[#allocation0]]
  $region90: #{tpu_custom_call.1} parent=0
    _
  %s15 = ssub.s32 1, %s13
  %s16 = scalar_select 0, %s15, %s13
  $region1: #{tpu_custom_call.1} parent=0
    #allocation2 [shape = 'u8[1024]{0}', space=vmem, size = 0x400, scoped, tag = 'input window, operand 0, single buffered']
    #allocation3 [shape = 's32[1]{0}', space=sflag, size = 0x4, scoped, tag = 'scoped memory for tpu_custom_call.1']
    #allocation4 [shape = 's32[1]{0}', space=sflag, size = 0x4, scoped, tag = 'scoped memory for tpu_custom_call.1']
    #allocation5 [shape = 'u8[32768]{0}', space=vmem, size = 0x8000, scoped, tag = 'input window, operand 2, single buffered']
    #allocation6 [shape = 's32[1]{0}', space=sflag, size = 0x4, scoped, tag = 'scoped memory for tpu_custom_call.1']
    #allocation7 [shape = 'u8[262144]{0}', space=vmem, size = 0x40000, scoped, tag = 'input window, operand 3, single buffered']
    #allocation8 [shape = 'u8[98304]{0}', space=vmem, size = 0x18000, scoped, tag = 'input window, operand 4, single buffered']
    #allocation9 [shape = 's32[1]{0}', space=sflag, size = 0x4, scoped, tag = 'scoped memory for tpu_custom_call.1']
    #allocation10 [shape = 'u8[98304]{0}', space=vmem, size = 0x18000, scoped, tag = 'input window, operand 5, single buffered']
    #allocation11 [shape = 'u8[65536]{0}', space=vmem, size = 0x10000, scoped, tag = 'input window, operand 6, single buffered']
    #allocation12 [shape = 's32[1]{0}', space=sflag, size = 0x4, scoped, tag = 'scoped memory for tpu_custom_call.1']
    #allocation13 [shape = 'u8[65536]{0}', space=vmem, size = 0x10000, scoped, tag = 'input window, operand 7, single buffered']
    #allocation14 [shape = 'u8[32768]{0}', space=vmem, size = 0x8000, scoped, tag = 'input window, operand 8, single buffered']
    #allocation15 [shape = 's32[1]{0}', space=sflag, size = 0x4, scoped, tag = 'scoped memory for tpu_custom_call.1']
    #allocation16 [shape = 'u8[1024]{0}', space=vmem, size = 0x400, scoped, tag = 'output window, operand 0, single buffered']
    #allocation17 [shape = 'u8[1024]{0}', space=vmem, size = 0x400, scoped, tag = 'output window, operand 1, single buffered']
    #allocation18 [shape = 's32[1]{0}', space=sflag, size = 0x4, scoped, tag = 'scoped memory for tpu_custom_call.1']
    %17 = vsyncpa [#allocation3], 0
    %18 = vsyncpa [#allocation6], 0
    %19 = vsyncpa [#allocation9], 0
    %20 = vsyncpa [#allocation12], 0
    %21 = vsyncpa [#allocation15], 0
    %22 = vsyncpa [#allocation4], 0
    %23 = vsyncpa [#allocation18], 0
    // Predicated region
    $region2: #{tpu_custom_call.1} parent=1 // pred_check
      _
    $region3: #{tpu_custom_call.1} parent=1 // pred_check_branch
      %25 = sbr.rel (0) target = $region5
    $region4: #{tpu_custom_call.1} parent=1 // pred_region
      %s27 = ssub.s32 32, 32
      %28 = vsyncadd [#allocation3], %s27
      %s30 = sshll.u32 [#allocation2], 4
      %s31 = int_to_ptr.vmem [resolvable:$true] %s30
      %33 = dma.hbm_to_vmem [thread:$0]  %s0, 32, %s31, [#allocation3]
    $region5: #{tpu_custom_call.1} parent=1 // pred_fallthru
      _
    // Predicated region
    $region6: #{tpu_custom_call.1} parent=1 // pred_check
      _
    $region7: #{tpu_custom_call.1} parent=1 // pred_check_branch
      %35 = sbr.rel (0) target = $region9
    $region8: #{tpu_custom_call.1} parent=1 // pred_region
      _
    $region9: #{tpu_custom_call.1} parent=1 // pred_fallthru
      _
    // Predicated region
    $region10: #{tpu_custom_call.1} parent=1 // pred_check
      _
    $region11: #{tpu_custom_call.1} parent=1 // pred_check_branch
      %37 = sbr.rel (0) target = $region13
    $region12: #{tpu_custom_call.1} parent=1 // pred_region
      %s39 = ssub.s32 1024, 1024
      %40 = vsyncadd [#allocation6], %s39
      %s41 = sshll.u32 [#allocation5], 4
      %s42 = int_to_ptr.vmem [resolvable:$true] %s41
      %47 = dma.hbm_to_vmem [thread:$0]  %s2, 1024, %s42, [#allocation6], 512, 512, 32
    $region13: #{tpu_custom_call.1} parent=1 // pred_fallthru
      _
    // Predicated region
    $region14: #{tpu_custom_call.1} parent=1 // pred_check
      _
    $region15: #{tpu_custom_call.1} parent=1 // pred_check_branch
      %49 = sbr.rel (0) target = $region17
    $region16: #{tpu_custom_call.1} parent=1 // pred_region
      %s51 = ssub.s32 8192, 8192
      %52 = vsyncadd [#allocation6], %s51
      %s53 = sshll.u32 [#allocation7], 4
      %s54 = int_to_ptr.vmem [resolvable:$true] %s53
      %59 = dma.hbm_to_vmem [thread:$0]  %s3, 8192, %s54, [#allocation6], 64, 64, 4
    $region17: #{tpu_custom_call.1} parent=1 // pred_fallthru
      _
    // Predicated region
    $region18: #{tpu_custom_call.1} parent=1 // pred_check
      _
    $region19: #{tpu_custom_call.1} parent=1 // pred_check_branch
      %61 = sbr.rel (0) target = $region21
    $region20: #{tpu_custom_call.1} parent=1 // pred_region
      %s63 = ssub.s32 3072, 3072
      %64 = vsyncadd [#allocation9], %s63
      %s65 = sshll.u32 [#allocation8], 4
      %s66 = int_to_ptr.vmem [resolvable:$true] %s65
      %71 = dma.hbm_to_vmem [thread:$0]  %s4, 3072, %s66, [#allocation9], 192, 192, 12
    $region21: #{tpu_custom_call.1} parent=1 // pred_fallthru
      _
    // Predicated region
    $region22: #{tpu_custom_call.1} parent=1 // pred_check
      _
    $region23: #{tpu_custom_call.1} parent=1 // pred_check_branch
      %73 = sbr.rel (0) target = $region25
    $region24: #{tpu_custom_call.1} parent=1 // pred_region
      %s75 = ssub.s32 3072, 3072
      %76 = vsyncadd [#allocation9], %s75
      %s77 = sshll.u32 [#allocation10], 4
      %s78 = int_to_ptr.vmem [resolvable:$true] %s77
      %83 = dma.hbm_to_vmem [thread:$0]  %s5, 3072, %s78, [#allocation9], 192, 192, 12
    $region25: #{tpu_custom_call.1} parent=1 // pred_fallthru
      _
    // Predicated region
    $region26: #{tpu_custom_call.1} parent=1 // pred_check
      _
    $region27: #{tpu_custom_call.1} parent=1 // pred_check_branch
      %85 = sbr.rel (0) target = $region29
    $region28: #{tpu_custom_call.1} parent=1 // pred_region
      %s87 = ssub.s32 2048, 2048
      %88 = vsyncadd [#allocation12], %s87
      %s89 = sshll.u32 [#allocation11], 4
      %s90 = int_to_ptr.vmem [resolvable:$true] %s89
      %95 = dma.hbm_to_vmem [thread:$0]  %s6, 2048, %s90, [#allocation12], 128, 128, 8
    $region29: #{tpu_custom_call.1} parent=1 // pred_fallthru
      _
    // Predicated region
    $region30: #{tpu_custom_call.1} parent=1 // pred_check
      _
    $region31: #{tpu_custom_call.1} parent=1 // pred_check_branch
      %97 = sbr.rel (0) target = $region33
    $region32: #{tpu_custom_call.1} parent=1 // pred_region
      %s99 = ssub.s32 2048, 2048
      %100 = vsyncadd [#allocation12], %s99
      %s101 = sshll.u32 [#allocation13], 4
      %s102 = int_to_ptr.vmem [resolvable:$true] %s101
      %107 = dma.hbm_to_vmem [thread:$0]  %s7, 2048, %s102, [#allocation12], 64, 64, 4
    $region33: #{tpu_custom_call.1} parent=1 // pred_fallthru
      _
    // Predicated region
    $region34: #{tpu_custom_call.1} parent=1 // pred_check
      _
    $region35: #{tpu_custom_call.1} parent=1 // pred_check_branch
      %109 = sbr.rel (0) target = $region37
    $region36: #{tpu_custom_call.1} parent=1 // pred_region
      %s111 = ssub.s32 1024, 1024
      %112 = vsyncadd [#allocation15], %s111
      %s113 = sshll.u32 [#allocation14], 4
      %s114 = int_to_ptr.vmem [resolvable:$true] %s113
      %119 = dma.hbm_to_vmem [thread:$0]  %s8, 1024, %s114, [#allocation15], 64, 64, 4
    $region37: #{tpu_custom_call.1} parent=1 // pred_fallthru
      _
    // Predicated region
    $region38: #{tpu_custom_call.1} parent=1 // pred_check
      _
    $region39: #{tpu_custom_call.1} parent=1 // pred_check_branch
      %121 = sbr.rel (0) target = $region41
    $region40: #{tpu_custom_call.1} parent=1 // pred_region
      _
    $region41: #{tpu_custom_call.1} parent=1 // pred_fallthru
      _
    // Predicated region
    $region42: #{tpu_custom_call.1} parent=1 // pred_check
      _
    $region43: #{tpu_custom_call.1} parent=1 // pred_check_branch
      %123 = sbr.rel (0) target = $region45
    $region44: #{tpu_custom_call.1} parent=1 // pred_region
      %124 = dma.done [#allocation3], 32
    $region45: #{tpu_custom_call.1} parent=1 // pred_fallthru
      _
    // Predicated region
    $region46: #{tpu_custom_call.1} parent=1 // pred_check
      _
    $region47: #{tpu_custom_call.1} parent=1 // pred_check_branch
      %126 = sbr.rel (0) target = $region49
    $region48: #{tpu_custom_call.1} parent=1 // pred_region
      %127 = dma.done [#allocation6], 1024
    $region49: #{tpu_custom_call.1} parent=1 // pred_fallthru
      _
    // Predicated region
    $region50: #{tpu_custom_call.1} parent=1 // pred_check
      _
    $region51: #{tpu_custom_call.1} parent=1 // pred_check_branch
      %129 = sbr.rel (0) target = $region53
    $region52: #{tpu_custom_call.1} parent=1 // pred_region
      %130 = dma.done [#allocation6], 8192
    $region53: #{tpu_custom_call.1} parent=1 // pred_fallthru
      _
    // Predicated region
    $region54: #{tpu_custom_call.1} parent=1 // pred_check
      _
    $region55: #{tpu_custom_call.1} parent=1 // pred_check_branch
      %132 = sbr.rel (0) target = $region57
    $region56: #{tpu_custom_call.1} parent=1 // pred_region
      %133 = dma.done [#allocation9], 3072
    $region57: #{tpu_custom_call.1} parent=1 // pred_fallthru
      _
    // Predicated region
    $region58: #{tpu_custom_call.1} parent=1 // pred_check
      _
    $region59: #{tpu_custom_call.1} parent=1 // pred_check_branch
      %135 = sbr.rel (0) target = $region61
    $region60: #{tpu_custom_call.1} parent=1 // pred_region
      %136 = dma.done [#allocation9], 3072
    $region61: #{tpu_custom_call.1} parent=1 // pred_fallthru
      _
    // Predicated region
    $region62: #{tpu_custom_call.1} parent=1 // pred_check
      _
    $region63: #{tpu_custom_call.1} parent=1 // pred_check_branch
      %138 = sbr.rel (0) target = $region65
    $region64: #{tpu_custom_call.1} parent=1 // pred_region
      %139 = dma.done [#allocation12], 2048
    $region65: #{tpu_custom_call.1} parent=1 // pred_fallthru
      _
    // Predicated region
    $region66: #{tpu_custom_call.1} parent=1 // pred_check
      _
    $region67: #{tpu_custom_call.1} parent=1 // pred_check_branch
      %141 = sbr.rel (0) target = $region69
    $region68: #{tpu_custom_call.1} parent=1 // pred_region
      %142 = dma.done [#allocation12], 2048
    $region69: #{tpu_custom_call.1} parent=1 // pred_fallthru
      _
    // Predicated region
    $region70: #{tpu_custom_call.1} parent=1 // pred_check
      _
    $region71: #{tpu_custom_call.1} parent=1 // pred_check_branch
      %144 = sbr.rel (0) target = $region73
    $region72: #{tpu_custom_call.1} parent=1 // pred_region
      %145 = dma.done [#allocation15], 1024
    $region73: #{tpu_custom_call.1} parent=1 // pred_fallthru
      _
    %v147 = vld [vmem:[#allocation2] sm:$0x3]
    %v148 = vld [vmem:[#allocation5] sm:$0xff]
    %v149 = vld [vmem:[#allocation5 + $0x8] sm:$0xff]
    %v150 = vld [vmem:[#allocation5 + $0x10] sm:$0xff]
    %v151 = vld [vmem:[#allocation5 + $0x18] sm:$0xff]
    %v152 = vld [vmem:[#allocation5 + $0x20] sm:$0xff]
    %v153 = vld [vmem:[#allocation5 + $0x28] sm:$0xff]
    %v154 = vld [vmem:[#allocation5 + $0x30] sm:$0xff]
    %v155 = vld [vmem:[#allocation5 + $0x38] sm:$0xff]
    %v156 = vpack.c.bf16 %v147, %v147
    %v165 = vunpack.c.l.b16 %v148
    %v166 = vunpack.c.h.b16 %v148
    %v167 = vunpack.c.l.b16 %v149
    %v168 = vunpack.c.h.b16 %v149
    %v169 = vunpack.c.l.b16 %v150
    %v170 = vunpack.c.h.b16 %v150
    %v171 = vunpack.c.l.b16 %v151
    %v172 = vunpack.c.h.b16 %v151
    %v173 = vunpack.c.l.b16 %v152
    %v174 = vunpack.c.h.b16 %v152
    %v175 = vunpack.c.l.b16 %v153
    %v176 = vunpack.c.h.b16 %v153
    %v177 = vunpack.c.l.b16 %v154
    %v178 = vunpack.c.h.b16 %v154
    %v179 = vunpack.c.l.b16 %v155
    %v180 = vunpack.c.h.b16 %v155
    %v181 = vpack.c.b16 %v173, %v165
    %v182 = vpack.c.b16 %v174, %v166
    %v183 = vpack.c.b16 %v175, %v167
    %v184 = vpack.c.b16 %v176, %v168
    %v185 = vpack.c.b16 %v177, %v169
    %v186 = vpack.c.b16 %v178, %v170
    %v187 = vpack.c.b16 %v179, %v171
    %v188 = vpack.c.b16 %v180, %v172
    %vm197 = vcmask 130048
    %v199 = vsel %vm197, %v156, 0
    %201 = vmatprep.subr.bf16.mxu0 %v182
    %202 = vmatpush1.bf16.msra.mxu0 %v181
    %203 = vmatprep.subr.bf16.mxu0 0
    %204 = vmatpush1.bf16.msra.mxu0 0
    %205 = vmatprep.subr.bf16.mxu0 0
    %206 = vmatpush1.bf16.msra.mxu0 0
    %207 = vmatprep.subr.bf16.mxu0 0
    %208 = vmatpush1.bf16.msra.mxu0 0
    %209 = vmatprep.subr.bf16.mxu0 0
    %210 = vmatpush1.bf16.msra.mxu0 0
    %211 = vmatprep.subr.bf16.mxu0 0
    %212 = vmatpush1.bf16.msra.mxu0 0
    %213 = vmatprep.subr.bf16.mxu0 0
    %214 = vmatpush1.bf16.msra.mxu0 0
    %215 = vmatprep.subr.bf16.mxu0 0
    %216 = vmatpush1.bf16.msra.mxu0 0
    %217 = vmatprep.subr.bf16.mxu0 0
    %218 = vmatpush1.bf16.msra.mxu0 0
    %219 = vmatprep.subr.bf16.mxu0 0
    %220 = vmatpush1.bf16.msra.mxu0 0
    %221 = vmatprep.subr.bf16.mxu0 0
    %222 = vmatpush1.bf16.msra.mxu0 0
    %223 = vmatprep.subr.bf16.mxu0 0
    %224 = vmatpush1.bf16.msra.mxu0 0
    %225 = vmatprep.subr.bf16.mxu0 0
    %226 = vmatpush1.bf16.msra.mxu0 0
    %227 = vmatprep.subr.bf16.mxu0 0
    %228 = vmatpush1.bf16.msra.mxu0 0
    %229 = vmatprep.subr.bf16.mxu0 0
    %230 = vmatpush1.bf16.msra.mxu0 0
    %231 = vmatprep.subr.bf16.mxu0 0
    %232 = vmatpush1.bf16.msra.mxu0 0
    %233 = vmatprep.mubr.bf16.mxu0 0
    %234 = vmatmul.mubr.bf16.gmra.mrb[0].mxu0 %v199
    %v235 = vpop.f32.mrb[0].mxu0
    %v236 = vadd.f32 0.0, %v235
    %v237 = vpop.f32.mrb[0].mxu0
    %v238 = vadd.f32 0.0, %v237
    %v239 = vpop.f32.mrb[0].mxu0
    %v240 = vpop.f32.mrb[0].mxu0
    %241 = vdwg.mxu0
    %242 = vmatprep.subr.bf16.mxu0 %v184
    %243 = vmatpush1.bf16.msra.mxu0 %v183
    %244 = vmatprep.subr.bf16.mxu0 0
    %245 = vmatpush1.bf16.msra.mxu0 0
    %246 = vmatprep.subr.bf16.mxu0 0
    %247 = vmatpush1.bf16.msra.mxu0 0
    %248 = vmatprep.subr.bf16.mxu0 0
    %249 = vmatpush1.bf16.msra.mxu0 0
    %250 = vmatprep.subr.bf16.mxu0 0
    %251 = vmatpush1.bf16.msra.mxu0 0
    %252 = vmatprep.subr.bf16.mxu0 0
    %253 = vmatpush1.bf16.msra.mxu0 0
    %254 = vmatprep.subr.bf16.mxu0 0
    %255 = vmatpush1.bf16.msra.mxu0 0
    %256 = vmatprep.subr.bf16.mxu0 0
    %257 = vmatpush1.bf16.msra.mxu0 0
    %258 = vmatprep.subr.bf16.mxu0 0
    %259 = vmatpush1.bf16.msra.mxu0 0
    %260 = vmatprep.subr.bf16.mxu0 0
    %261 = vmatpush1.bf16.msra.mxu0 0
    %262 = vmatprep.subr.bf16.mxu0 0
    %263 = vmatpush1.bf16.msra.mxu0 0
    %264 = vmatprep.subr.bf16.mxu0 0
    %265 = vmatpush1.bf16.msra.mxu0 0
    %266 = vmatprep.subr.bf16.mxu0 0
    %267 = vmatpush1.bf16.msra.mxu0 0
    %268 = vmatprep.subr.bf16.mxu0 0
    %269 = vmatpush1.bf16.msra.mxu0 0
    %270 = vmatprep.subr.bf16.mxu0 0
    %271 = vmatpush1.bf16.msra.mxu0 0
    %272 = vmatprep.subr.bf16.mxu0 0
    %273 = vmatpush1.bf16.msra.mxu0 0
    %274 = vmatprep.mubr.bf16.mxu0 0
    %275 = vmatmul.mubr.bf16.gmra.mrb[0].mxu0 %v199
    %v276 = vpop.f32.mrb[0].mxu0
    %v277 = vadd.f32 0.0, %v276
    %v278 = vpop.f32.mrb[0].mxu0
    %v279 = vadd.f32 0.0, %v278
    %v280 = vpop.f32.mrb[0].mxu0
    %v281 = vpop.f32.mrb[0].mxu0
    %282 = vdwg.mxu0
    %283 = vmatprep.subr.bf16.mxu0 %v186
    %284 = vmatpush1.bf16.msra.mxu0 %v185
    %285 = vmatprep.subr.bf16.mxu0 0
    %286 = vmatpush1.bf16.msra.mxu0 0
    %287 = vmatprep.subr.bf16.mxu0 0
    %288 = vmatpush1.bf16.msra.mxu0 0
    %289 = vmatprep.subr.bf16.mxu0 0
    %290 = vmatpush1.bf16.msra.mxu0 0
    %291 = vmatprep.subr.bf16.mxu0 0
    %292 = vmatpush1.bf16.msra.mxu0 0
    %293 = vmatprep.subr.bf16.mxu0 0
    %294 = vmatpush1.bf16.msra.mxu0 0
    %295 = vmatprep.subr.bf16.mxu0 0
    %296 = vmatpush1.bf16.msra.mxu0 0
    %297 = vmatprep.subr.bf16.mxu0 0
    %298 = vmatpush1.bf16.msra.mxu0 0
    %299 = vmatprep.subr.bf16.mxu0 0
    %300 = vmatpush1.bf16.msra.mxu0 0
    %301 = vmatprep.subr.bf16.mxu0 0
    %302 = vmatpush1.bf16.msra.mxu0 0
    %303 = vmatprep.subr.bf16.mxu0 0
    %304 = vmatpush1.bf16.msra.mxu0 0
    %305 = vmatprep.subr.bf16.mxu0 0
    %306 = vmatpush1.bf16.msra.mxu0 0
    %307 = vmatprep.subr.bf16.mxu0 0
    %308 = vmatpush1.bf16.msra.mxu0 0
    %309 = vmatprep.subr.bf16.mxu0 0
    %310 = vmatpush1.bf16.msra.mxu0 0
    %311 = vmatprep.subr.bf16.mxu0 0
    %312 = vmatpush1.bf16.msra.mxu0 0
    %313 = vmatprep.subr.bf16.mxu0 0
    %314 = vmatpush1.bf16.msra.mxu0 0
    %315 = vmatprep.mubr.bf16.mxu0 0
    %316 = vmatmul.mubr.bf16.gmra.mrb[0].mxu0 %v199
    %v317 = vpop.f32.mrb[0].mxu0
    %v318 = vadd.f32 0.0, %v317
    %v319 = vpop.f32.mrb[0].mxu0
    %v320 = vadd.f32 0.0, %v319
    %v321 = vpop.f32.mrb[0].mxu0
    %v322 = vpop.f32.mrb[0].mxu0
    %323 = vdwg.mxu0
    %324 = vmatprep.subr.bf16.mxu0 %v188
    %325 = vmatpush1.bf16.msra.mxu0 %v187
    %326 = vmatprep.subr.bf16.mxu0 0
    %327 = vmatpush1.bf16.msra.mxu0 0
    %328 = vmatprep.subr.bf16.mxu0 0
    %329 = vmatpush1.bf16.msra.mxu0 0
    %330 = vmatprep.subr.bf16.mxu0 0
    %331 = vmatpush1.bf16.msra.mxu0 0
    %332 = vmatprep.subr.bf16.mxu0 0
    %333 = vmatpush1.bf16.msra.mxu0 0
    %334 = vmatprep.subr.bf16.mxu0 0
    %335 = vmatpush1.bf16.msra.mxu0 0
    %336 = vmatprep.subr.bf16.mxu0 0
    %337 = vmatpush1.bf16.msra.mxu0 0
    %338 = vmatprep.subr.bf16.mxu0 0
    %339 = vmatpush1.bf16.msra.mxu0 0
    %340 = vmatprep.subr.bf16.mxu0 0
    %341 = vmatpush1.bf16.msra.mxu0 0
    %342 = vmatprep.subr.bf16.mxu0 0
    %343 = vmatpush1.bf16.msra.mxu0 0
    %344 = vmatprep.subr.bf16.mxu0 0
    %345 = vmatpush1.bf16.msra.mxu0 0
    %346 = vmatprep.subr.bf16.mxu0 0
    %347 = vmatpush1.bf16.msra.mxu0 0
    %348 = vmatprep.subr.bf16.mxu0 0
    %349 = vmatpush1.bf16.msra.mxu0 0
    %350 = vmatprep.subr.bf16.mxu0 0
    %351 = vmatpush1.bf16.msra.mxu0 0
    %352 = vmatprep.subr.bf16.mxu0 0
    %353 = vmatpush1.bf16.msra.mxu0 0
    %354 = vmatprep.subr.bf16.mxu0 0
    %355 = vmatpush1.bf16.msra.mxu0 0
    %356 = vmatprep.mubr.bf16.mxu0 0
    %357 = vmatmul.mubr.bf16.gmra.mrb[0].mxu0 %v199
    %v358 = vpop.f32.mrb[0].mxu0
    %v359 = vadd.f32 0.0, %v358
    %v360 = vpop.f32.mrb[0].mxu0
    %v361 = vadd.f32 0.0, %v360
    %v362 = vpop.f32.mrb[0].mxu0
    %v363 = vpop.f32.mrb[0].mxu0
    %364 = vdwg.mxu0
    %vm365 = vcmask 1041408
    %v366 = vsel %vm365, %v236, 0.0
    %v367 = vrot.slane %v366, 4
    %v368 = vadd.f32 %v366, %v367
    %v369 = vrot.slane %v368, 2
    %v370 = vadd.f32 %v368, %v369
    %v371 = vrot.slane %v370, 1
    %v372 = vadd.f32 %v370, %v371
    %v373 = vsel %vm365, %v238, 0.0
    %v374 = vrot.slane %v373, 4
    %v375 = vadd.f32 %v373, %v374
    %v376 = vrot.slane %v375, 2
    %v377 = vadd.f32 %v375, %v376
    %v378 = vrot.slane %v377, 1
    %v379 = vadd.f32 %v377, %v378
    %v380 = vsel %vm365, %v277, 0.0
    %v381 = vrot.slane %v380, 4
    %v382 = vadd.f32 %v380, %v381
    %v383 = vrot.slane %v382, 2
    %v384 = vadd.f32 %v382, %v383
    %v385 = vrot.slane %v384, 1
    %v386 = vadd.f32 %v384, %v385
    %v387 = vsel %vm365, %v279, 0.0
    %v388 = vrot.slane %v387, 4
    %v389 = vadd.f32 %v387, %v388
    %v390 = vrot.slane %v389, 2
    %v391 = vadd.f32 %v389, %v390
    %v392 = vrot.slane %v391, 1
    %v393 = vadd.f32 %v391, %v392
    %v394 = vsel %vm365, %v318, 0.0
    %v395 = vrot.slane %v394, 4
    %v396 = vadd.f32 %v394, %v395
    %v397 = vrot.slane %v396, 2
    %v398 = vadd.f32 %v396, %v397
    %v399 = vrot.slane %v398, 1
    %v400 = vadd.f32 %v398, %v399
    %v401 = vsel %vm365, %v320, 0.0
    %v402 = vrot.slane %v401, 4
    %v403 = vadd.f32 %v401, %v402
    %v404 = vrot.slane %v403, 2
    %v405 = vadd.f32 %v403, %v404
    %v406 = vrot.slane %v405, 1
    %v407 = vadd.f32 %v405, %v406
    %v408 = vsel %vm365, %v359, 0.0
    %v409 = vrot.slane %v408, 4
    %v410 = vadd.f32 %v408, %v409
    %v411 = vrot.slane %v410, 2
    %v412 = vadd.f32 %v410, %v411
    %v413 = vrot.slane %v412, 1
    %v414 = vadd.f32 %v412, %v413
    %v415 = vsel %vm365, %v361, 0.0
    %v416 = vrot.slane %v415, 4
    %v417 = vadd.f32 %v415, %v416
    %v418 = vrot.slane %v417, 2
    %v419 = vadd.f32 %v417, %v418
    %v420 = vrot.slane %v419, 1
    %v421 = vadd.f32 %v419, %v420
    %v422 = vrcp.pop 2.0
    %v423 = vmul.f32 %v372, %v422
    %v424 = vmul.f32 %v379, %v422
    %v425 = vmul.f32 %v386, %v422
    %v426 = vmul.f32 %v393, %v422
    %v427 = vmul.f32 %v400, %v422
    %v428 = vmul.f32 %v407, %v422
    %v429 = vmul.f32 %v414, %v422
    %v430 = vmul.f32 %v421, %v422
    %v431 = vsub.f32 %v236, %v423
    %v432 = vsub.f32 %v238, %v424
    %v433 = vsub.f32 %v277, %v425
    %v434 = vsub.f32 %v279, %v426
    %v435 = vsub.f32 %v318, %v427
    %v436 = vsub.f32 %v320, %v428
    %v437 = vsub.f32 %v359, %v429
    %v438 = vsub.f32 %v361, %v430
    %v439 = vmul.f32 %v431, %v431
    %v440 = vmul.f32 %v432, %v432
    %v441 = vmul.f32 %v433, %v433
    %v442 = vmul.f32 %v434, %v434
    %v443 = vmul.f32 %v435, %v435
    %v444 = vmul.f32 %v436, %v436
    %v445 = vmul.f32 %v437, %v437
    %v446 = vmul.f32 %v438, %v438
    %v447 = vsel %vm365, %v439, 0.0
    %v448 = vrot.slane %v447, 4
    %v449 = vadd.f32 %v447, %v448
    %v450 = vrot.slane %v449, 2
    %v451 = vadd.f32 %v449, %v450
    %v452 = vrot.slane %v451, 1
    %v453 = vadd.f32 %v451, %v452
    %v454 = vsel %vm365, %v440, 0.0
    %v455 = vrot.slane %v454, 4
    %v456 = vadd.f32 %v454, %v455
    %v457 = vrot.slane %v456, 2
    %v458 = vadd.f32 %v456, %v457
    %v459 = vrot.slane %v458, 1
    %v460 = vadd.f32 %v458, %v459
    %v461 = vsel %vm365, %v441, 0.0
    %v462 = vrot.slane %v461, 4
    %v463 = vadd.f32 %v461, %v462
    %v464 = vrot.slane %v463, 2
    %v465 = vadd.f32 %v463, %v464
    %v466 = vrot.slane %v465, 1
    %v467 = vadd.f32 %v465, %v466
    %v468 = vsel %vm365, %v442, 0.0
    %v469 = vrot.slane %v468, 4
    %v470 = vadd.f32 %v468, %v469
    %v471 = vrot.slane %v470, 2
    %v472 = vadd.f32 %v470, %v471
    %v473 = vrot.slane %v472, 1
    %v474 = vadd.f32 %v472, %v473
    %v475 = vsel %vm365, %v443, 0.0
    %v476 = vrot.slane %v475, 4
    %v477 = vadd.f32 %v475, %v476
    %v478 = vrot.slane %v477, 2
    %v479 = vadd.f32 %v477, %v478
    %v480 = vrot.slane %v479, 1
    %v481 = vadd.f32 %v479, %v480
    %v482 = vsel %vm365, %v444, 0.0
    %v483 = vrot.slane %v482, 4
    %v484 = vadd.f32 %v482, %v483
    %v485 = vrot.slane %v484, 2
    %v486 = vadd.f32 %v484, %v485
    %v487 = vrot.slane %v486, 1
    %v488 = vadd.f32 %v486, %v487
    %v489 = vsel %vm365, %v445, 0.0
    %v490 = vrot.slane %v489, 4
    %v491 = vadd.f32 %v489, %v490
    %v492 = vrot.slane %v491, 2
    %v493 = vadd.f32 %v491, %v492
    %v494 = vrot.slane %v493, 1
    %v495 = vadd.f32 %v493, %v494
    %v496 = vsel %vm365, %v446, 0.0
    %v497 = vrot.slane %v496, 4
    %v498 = vadd.f32 %v496, %v497
    %v499 = vrot.slane %v498, 2
    %v500 = vadd.f32 %v498, %v499
    %v501 = vrot.slane %v500, 1
    %v502 = vadd.f32 %v500, %v501
    %v503 = vmul.f32 %v453, %v422
    %v504 = vmul.f32 %v460, %v422
    %v505 = vmul.f32 %v467, %v422
    %v506 = vmul.f32 %v474, %v422
    %v507 = vmul.f32 %v481, %v422
    %v508 = vmul.f32 %v488, %v422
    %v509 = vmul.f32 %v495, %v422
    %v510 = vmul.f32 %v502, %v422
    %v511 = vadd.f32 %v503, 1e-05
    %v512 = vadd.f32 %v504, 1e-05
    %v513 = vadd.f32 %v505, 1e-05
    %v514 = vadd.f32 %v506, 1e-05
    %v515 = vadd.f32 %v507, 1e-05
    %v516 = vadd.f32 %v508, 1e-05
    %v517 = vadd.f32 %v509, 1e-05
    %v518 = vadd.f32 %v510, 1e-05
    %v519 = vrsqrt.pop %v511
    %v520 = vrsqrt.pop %v512
    %v521 = vrsqrt.pop %v513
    %v522 = vrsqrt.pop %v514
    %v523 = vrsqrt.pop %v515
    %v524 = vrsqrt.pop %v516
    %v525 = vrsqrt.pop %v517
    %v526 = vrsqrt.pop %v518
    %v527 = vmul.f32 %v431, %v519
    %v528 = vmul.f32 %v432, %v520
    %v529 = vmul.f32 %v433, %v521
    %v530 = vmul.f32 %v434, %v522
    %v531 = vmul.f32 %v435, %v523
    %v532 = vmul.f32 %v436, %v524
    %v533 = vmul.f32 %v437, %v525
    %v534 = vmul.f32 %v438, %v526
    %v535 = vld [vmem:[%s9] sm:$0xff]
    %v537 = vlaneseq
    %v538 = vshrl.u32 %v537, 7
    %v539 = vsub.s32 0, %v538
    %v540 = vrot.slane %v535, %v539
    %v541 = vlaneseq
    %v542 = vshrl.u32 %v541, 7
    %v543 = vsub.s32 1, %v542
    %v544 = vrot.slane %v535, %v543
    %v545 = vlaneseq
    %v546 = vshrl.u32 %v545, 7
    %v547 = vsub.s32 2, %v546
    %v548 = vrot.slane %v535, %v547
    %v549 = vlaneseq
    %v550 = vshrl.u32 %v549, 7
    %v551 = vsub.s32 3, %v550
    %v552 = vrot.slane %v535, %v551
    %v553 = vlaneseq
    %v554 = vshrl.u32 %v553, 7
    %v555 = vsub.s32 4, %v554
    %v556 = vrot.slane %v535, %v555
    %v557 = vlaneseq
    %v558 = vshrl.u32 %v557, 7
    %v559 = vsub.s32 5, %v558
    %v560 = vrot.slane %v535, %v559
    %v561 = vlaneseq
    %v562 = vshrl.u32 %v561, 7
    %v563 = vsub.s32 6, %v562
    %v564 = vrot.slane %v535, %v563
    %v565 = vlaneseq
    %v566 = vshrl.u32 %v565, 7
    %v567 = vsub.s32 7, %v566
    %v568 = vrot.slane %v535, %v567
    %v577 = vmul.f32 %v527, %v540
    %v578 = vmul.f32 %v528, %v544
    %v579 = vmul.f32 %v529, %v548
    %v580 = vmul.f32 %v530, %v552
    %v581 = vmul.f32 %v531, %v556
    %v582 = vmul.f32 %v532, %v560
    %v583 = vmul.f32 %v533, %v564
    %v584 = vmul.f32 %v534, %v568
    %v585 = vld [vmem:[%s9 + $0x8] sm:$0xff]
    %v587 = vlaneseq
    %v588 = vshrl.u32 %v587, 7
    %v589 = vsub.s32 0, %v588
    %v590 = vrot.slane %v585, %v589
    %v591 = vlaneseq
    %v592 = vshrl.u32 %v591, 7
    %v593 = vsub.s32 1, %v592
    %v594 = vrot.slane %v585, %v593
    %v595 = vlaneseq
    %v596 = vshrl.u32 %v595, 7
    %v597 = vsub.s32 2, %v596
    %v598 = vrot.slane %v585, %v597
    %v599 = vlaneseq
    %v600 = vshrl.u32 %v599, 7
    %v601 = vsub.s32 3, %v600
    %v602 = vrot.slane %v585, %v601
    %v603 = vlaneseq
    %v604 = vshrl.u32 %v603, 7
    %v605 = vsub.s32 4, %v604
    %v606 = vrot.slane %v585, %v605
    %v607 = vlaneseq
    %v608 = vshrl.u32 %v607, 7
    %v609 = vsub.s32 5, %v608
    %v610 = vrot.slane %v585, %v609
    %v611 = vlaneseq
    %v612 = vshrl.u32 %v611, 7
    %v613 = vsub.s32 6, %v612
    %v614 = vrot.slane %v585, %v613
    %v615 = vlaneseq
    %v616 = vshrl.u32 %v615, 7
    %v617 = vsub.s32 7, %v616
    %v618 = vrot.slane %v585, %v617
    %v627 = vadd.f32 %v577, %v590
    %v628 = vadd.f32 %v578, %v594
    %v629 = vadd.f32 %v579, %v598
    %v630 = vadd.f32 %v580, %v602
    %v631 = vadd.f32 %v581, %v606
    %v632 = vadd.f32 %v582, %v610
    %v633 = vadd.f32 %v583, %v614
    %v634 = vadd.f32 %v584, %v618
    %v635 = vmax.f32 %v627, 0.0
    %v636 = vmax.f32 %v628, 0.0
    %v637 = vmax.f32 %v629, 0.0
    %v638 = vmax.f32 %v630, 0.0
    %v639 = vmax.f32 %v631, 0.0
    %v640 = vmax.f32 %v632, 0.0
    %v641 = vmax.f32 %v633, 0.0
    %v642 = vmax.f32 %v634, 0.0
    %v643 = vld [vmem:[#allocation7] sm:$0xf]
    %v644 = vld [vmem:[#allocation7 + $0x4] sm:$0xf]
    %v645 = vld [vmem:[#allocation7 + $0x8] sm:$0xf]
    %v646 = vld [vmem:[#allocation7 + $0xc] sm:$0xf]
    %v647 = vld [vmem:[#allocation7 + $0x10] sm:$0xf]
    %v648 = vld [vmem:[#allocation7 + $0x14] sm:$0xf]
    %v649 = vld [vmem:[#allocation7 + $0x18] sm:$0xf]
    %v650 = vld [vmem:[#allocation7 + $0x1c] sm:$0xf]
    %v651 = vld [vmem:[#allocation7 + $0x20] sm:$0xf]
    %v652 = vld [vmem:[#allocation7 + $0x24] sm:$0xf]
    %v653 = vld [vmem:[#allocation7 + $0x28] sm:$0xf]
    %v654 = vld [vmem:[#allocation7 + $0x2c] sm:$0xf]
    %v655 = vld [vmem:[#allocation7 + $0x30] sm:$0xf]
    %v656 = vld [vmem:[#allocation7 + $0x34] sm:$0xf]
    %v657 = vld [vmem:[#allocation7 + $0x38] sm:$0xf]
    %v658 = vld [vmem:[#allocation7 + $0x3c] sm:$0xf]
    %v659 = vld [vmem:[#allocation7 + $0x40] sm:$0xf]
    %v660 = vld [vmem:[#allocation7 + $0x44] sm:$0xf]
    %v661 = vld [vmem:[#allocation7 + $0x48] sm:$0xf]
    %v662 = vld [vmem:[#allocation7 + $0x4c] sm:$0xf]
    %v663 = vld [vmem:[#allocation7 + $0x50] sm:$0xf]
    %v664 = vld [vmem:[#allocation7 + $0x54] sm:$0xf]
    %v665 = vld [vmem:[#allocation7 + $0x58] sm:$0xf]
    %v666 = vld [vmem:[#allocation7 + $0x5c] sm:$0xf]
    %v667 = vld [vmem:[#allocation7 + $0x60] sm:$0xf]
    %v668 = vld [vmem:[#allocation7 + $0x64] sm:$0xf]
    %v669 = vld [vmem:[#allocation7 + $0x68] sm:$0xf]
    %v670 = vld [vmem:[#allocation7 + $0x6c] sm:$0xf]
    %v671 = vld [vmem:[#allocation7 + $0x70] sm:$0xf]
    %v672 = vld [vmem:[#allocation7 + $0x74] sm:$0xf]
    %v673 = vld [vmem:[#allocation7 + $0x78] sm:$0xf]
    %v674 = vld [vmem:[#allocation7 + $0x7c] sm:$0xf]
    %v675 = vld [vmem:[#allocation7 + $0x80] sm:$0xf]
    %v676 = vld [vmem:[#allocation7 + $0x84] sm:$0xf]
    %v677 = vld [vmem:[#allocation7 + $0x88] sm:$0xf]
    %v678 = vld [vmem:[#allocation7 + $0x8c] sm:$0xf]
    %v679 = vld [vmem:[#allocation7 + $0x90] sm:$0xf]
    %v680 = vld [vmem:[#allocation7 + $0x94] sm:$0xf]
    %v681 = vld [vmem:[#allocation7 + $0x98] sm:$0xf]
    %v682 = vld [vmem:[#allocation7 + $0x9c] sm:$0xf]
    %v683 = vld [vmem:[#allocation7 + $0xa0] sm:$0xf]
    %v684 = vld [vmem:[#allocation7 + $0xa4] sm:$0xf]
    %v685 = vld [vmem:[#allocation7 + $0xa8] sm:$0xf]
    %v686 = vld [vmem:[#allocation7 + $0xac] sm:$0xf]
    %v687 = vld [vmem:[#allocation7 + $0xb0] sm:$0xf]
    %v688 = vld [vmem:[#allocation7 + $0xb4] sm:$0xf]
    %v689 = vld [vmem:[#allocation7 + $0xb8] sm:$0xf]
    %v690 = vld [vmem:[#allocation7 + $0xbc] sm:$0xf]
    %v691 = vld [vmem:[#allocation7 + $0xc0] sm:$0xf]
    %v692 = vld [vmem:[#allocation7 + $0xc4] sm:$0xf]
    %v693 = vld [vmem:[#allocation7 + $0xc8] sm:$0xf]
    %v694 = vld [vmem:[#allocation7 + $0xcc] sm:$0xf]
    %v695 = vld [vmem:[#allocation7 + $0xd0] sm:$0xf]
    %v696 = vld [vmem:[#allocation7 + $0xd4] sm:$0xf]
    %v697 = vld [vmem:[#allocation7 + $0xd8] sm:$0xf]
    %v698 = vld [vmem:[#allocation7 + $0xdc] sm:$0xf]
    %v699 = vld [vmem:[#allocation7 + $0xe0] sm:$0xf]
    %v700 = vld [vmem:[#allocation7 + $0xe4] sm:$0xf]
    %v701 = vld [vmem:[#allocation7 + $0xe8] sm:$0xf]
    %v702 = vld [vmem:[#allocation7 + $0xec] sm:$0xf]
    %v703 = vld [vmem:[#allocation7 + $0xf0] sm:$0xf]
    %v704 = vld [vmem:[#allocation7 + $0xf4] sm:$0xf]
    %v705 = vld [vmem:[#allocation7 + $0xf8] sm:$0xf]
    %v706 = vld [vmem:[#allocation7 + $0xfc] sm:$0xf]
    %v707 = vld [vmem:[#allocation7 + $0x100] sm:$0xf]
    %v708 = vld [vmem:[#allocation7 + $0x104] sm:$0xf]
    %v709 = vld [vmem:[#allocation7 + $0x108] sm:$0xf]
    %v710 = vld [vmem:[#allocation7 + $0x10c] sm:$0xf]
    %v711 = vld [vmem:[#allocation7 + $0x110] sm:$0xf]
    %v712 = vld [vmem:[#allocation7 + $0x114] sm:$0xf]
    %v713 = vld [vmem:[#allocation7 + $0x118] sm:$0xf]
    %v714 = vld [vmem:[#allocation7 + $0x11c] sm:$0xf]
    %v715 = vld [vmem:[#allocation7 + $0x120] sm:$0xf]
    %v716 = vld [vmem:[#allocation7 + $0x124] sm:$0xf]
    %v717 = vld [vmem:[#allocation7 + $0x128] sm:$0xf]
    %v718 = vld [vmem:[#allocation7 + $0x12c] sm:$0xf]
    %v719 = vld [vmem:[#allocation7 + $0x130] sm:$0xf]
    %v720 = vld [vmem:[#allocation7 + $0x134] sm:$0xf]
    %v721 = vld [vmem:[#allocation7 + $0x138] sm:$0xf]
    %v722 = vld [vmem:[#allocation7 + $0x13c] sm:$0xf]
    %v723 = vld [vmem:[#allocation7 + $0x140] sm:$0xf]
    %v724 = vld [vmem:[#allocation7 + $0x144] sm:$0xf]
    %v725 = vld [vmem:[#allocation7 + $0x148] sm:$0xf]
    %v726 = vld [vmem:[#allocation7 + $0x14c] sm:$0xf]
    %v727 = vld [vmem:[#allocation7 + $0x150] sm:$0xf]
    %v728 = vld [vmem:[#allocation7 + $0x154] sm:$0xf]
    %v729 = vld [vmem:[#allocation7 + $0x158] sm:$0xf]
    %v730 = vld [vmem:[#allocation7 + $0x15c] sm:$0xf]
    %v731 = vld [vmem:[#allocation7 + $0x160] sm:$0xf]
    %v732 = vld [vmem:[#allocation7 + $0x164] sm:$0xf]
    %v733 = vld [vmem:[#allocation7 + $0x168] sm:$0xf]
    %v734 = vld [vmem:[#allocation7 + $0x16c] sm:$0xf]
    %v735 = vld [vmem:[#allocation7 + $0x170] sm:$0xf]
    %v736 = vld [vmem:[#allocation7 + $0x174] sm:$0xf]
    %v737 = vld [vmem:[#allocation7 + $0x178] sm:$0xf]
    %v738 = vld [vmem:[#allocation7 + $0x17c] sm:$0xf]
    %v739 = vld [vmem:[#allocation7 + $0x180] sm:$0xf]
    %v740 = vld [vmem:[#allocation7 + $0x184] sm:$0xf]
    %v741 = vld [vmem:[#allocation7 + $0x188] sm:$0xf]
    %v742 = vld [vmem:[#allocation7 + $0x18c] sm:$0xf]
    %v743 = vld [vmem:[#allocation7 + $0x190] sm:$0xf]
    %v744 = vld [vmem:[#allocation7 + $0x194] sm:$0xf]
    %v745 = vld [vmem:[#allocation7 + $0x198] sm:$0xf]
    %v746 = vld [vmem:[#allocation7 + $0x19c] sm:$0xf]
    %v747 = vld [vmem:[#allocation7 + $0x1a0] sm:$0xf]
    %v748 = vld [vmem:[#allocation7 + $0x1a4] sm:$0xf]
    %v749 = vld [vmem:[#allocation7 + $0x1a8] sm:$0xf]
    %v750 = vld [vmem:[#allocation7 + $0x1ac] sm:$0xf]
    %v751 = vld [vmem:[#allocation7 + $0x1b0] sm:$0xf]
    %v752 = vld [vmem:[#allocation7 + $0x1b4] sm:$0xf]
    %v753 = vld [vmem:[#allocation7 + $0x1b8] sm:$0xf]
    %v754 = vld [vmem:[#allocation7 + $0x1bc] sm:$0xf]
    %v755 = vld [vmem:[#allocation7 + $0x1c0] sm:$0xf]
    %v756 = vld [vmem:[#allocation7 + $0x1c4] sm:$0xf]
    %v757 = vld [vmem:[#allocation7 + $0x1c8] sm:$0xf]
    %v758 = vld [vmem:[#allocation7 + $0x1cc] sm:$0xf]
    %v759 = vld [vmem:[#allocation7 + $0x1d0] sm:$0xf]
    %v760 = vld [vmem:[#allocation7 + $0x1d4] sm:$0xf]
    %v761 = vld [vmem:[#allocation7 + $0x1d8] sm:$0xf]
    %v762 = vld [vmem:[#allocation7 + $0x1dc] sm:$0xf]
    %v763 = vld [vmem:[#allocation7 + $0x1e0] sm:$0xf]
    %v764 = vld [vmem:[#allocation7 + $0x1e4] sm:$0xf]
    %v765 = vld [vmem:[#allocation7 + $0x1e8] sm:$0xf]
    %v766 = vld [vmem:[#allocation7 + $0x1ec] sm:$0xf]
    %v767 = vld [vmem:[#allocation7 + $0x1f0] sm:$0xf]
    %v768 = vld [vmem:[#allocation7 + $0x1f4] sm:$0xf]
    %v769 = vld [vmem:[#allocation7 + $0x1f8] sm:$0xf]
    %v770 = vld [vmem:[#allocation7 + $0x1fc] sm:$0xf]
    %v771 = vpack.c.bf16 %v635, %v635
    %v772 = vpack.c.bf16 %v636, %v636
    %v773 = vpack.c.bf16 %v637, %v637
    %v774 = vpack.c.bf16 %v638, %v638
    %v775 = vpack.c.bf16 %v639, %v639
    %v776 = vpack.c.bf16 %v640, %v640
    %v777 = vpack.c.bf16 %v641, %v641
    %v778 = vpack.c.bf16 %v642, %v642
    %v907 = vunpack.c.l.b16 %v643
    %v908 = vunpack.c.l.b16 %v644
    %v909 = vunpack.c.l.b16 %v645
    %v910 = vunpack.c.l.b16 %v646
    %v911 = vunpack.c.l.b16 %v647
    %v912 = vunpack.c.l.b16 %v648
    %v913 = vunpack.c.l.b16 %v649
    %v914 = vunpack.c.l.b16 %v650
    %v915 = vunpack.c.l.b16 %v651
    %v916 = vunpack.c.l.b16 %v652
    %v917 = vunpack.c.l.b16 %v653
    %v918 = vunpack.c.l.b16 %v654
    %v919 = vunpack.c.l.b16 %v655
    %v920 = vunpack.c.l.b16 %v656
    %v921 = vunpack.c.l.b16 %v657
    %v922 = vunpack.c.l.b16 %v658
    %v923 = vunpack.c.l.b16 %v659
    %v924 = vunpack.c.l.b16 %v660
    %v925 = vunpack.c.l.b16 %v661
    %v926 = vunpack.c.l.b16 %v662
    %v927 = vunpack.c.l.b16 %v663
    %v928 = vunpack.c.l.b16 %v664
    %v929 = vunpack.c.l.b16 %v665
    %v930 = vunpack.c.l.b16 %v666
    %v931 = vunpack.c.l.b16 %v667
    %v932 = vunpack.c.l.b16 %v668
    %v933 = vunpack.c.l.b16 %v669
    %v934 = vunpack.c.l.b16 %v670
    %v935 = vunpack.c.l.b16 %v671
    %v936 = vunpack.c.l.b16 %v672
    %v937 = vunpack.c.l.b16 %v673
    %v938 = vunpack.c.l.b16 %v674
    %v939 = vunpack.c.l.b16 %v675
    %v940 = vunpack.c.l.b16 %v676
    %v941 = vunpack.c.l.b16 %v677
    %v942 = vunpack.c.l.b16 %v678
    %v943 = vunpack.c.l.b16 %v679
    %v944 = vunpack.c.l.b16 %v680
    %v945 = vunpack.c.l.b16 %v681
    %v946 = vunpack.c.l.b16 %v682
    %v947 = vunpack.c.l.b16 %v683
    %v948 = vunpack.c.l.b16 %v684
    %v949 = vunpack.c.l.b16 %v685
    %v950 = vunpack.c.l.b16 %v686
    %v951 = vunpack.c.l.b16 %v687
    %v952 = vunpack.c.l.b16 %v688
    %v953 = vunpack.c.l.b16 %v689
    %v954 = vunpack.c.l.b16 %v690
    %v955 = vunpack.c.l.b16 %v691
    %v956 = vunpack.c.l.b16 %v692
    %v957 = vunpack.c.l.b16 %v693
    %v958 = vunpack.c.l.b16 %v694
    %v959 = vunpack.c.l.b16 %v695
    %v960 = vunpack.c.l.b16 %v696
    %v961 = vunpack.c.l.b16 %v697
    %v962 = vunpack.c.l.b16 %v698
    %v963 = vunpack.c.l.b16 %v699
    %v964 = vunpack.c.l.b16 %v700
    %v965 = vunpack.c.l.b16 %v701
    %v966 = vunpack.c.l.b16 %v702
    %v967 = vunpack.c.l.b16 %v703
    %v968 = vunpack.c.l.b16 %v704
    %v969 = vunpack.c.l.b16 %v705
    %v970 = vunpack.c.l.b16 %v706
    %v971 = vunpack.c.l.b16 %v707
    %v972 = vunpack.c.l.b16 %v708
    %v973 = vunpack.c.l.b16 %v709
    %v974 = vunpack.c.l.b16 %v710
    %v975 = vunpack.c.l.b16 %v711
    %v976 = vunpack.c.l.b16 %v712
    %v977 = vunpack.c.l.b16 %v713
    %v978 = vunpack.c.l.b16 %v714
    %v979 = vunpack.c.l.b16 %v715
    %v980 = vunpack.c.l.b16 %v716
    %v981 = vunpack.c.l.b16 %v717
    %v982 = vunpack.c.l.b16 %v718
    %v983 = vunpack.c.l.b16 %v719
    %v984 = vunpack.c.l.b16 %v720
    %v985 = vunpack.c.l.b16 %v721
    %v986 = vunpack.c.l.b16 %v722
    %v987 = vunpack.c.l.b16 %v723
    %v988 = vunpack.c.l.b16 %v724
    %v989 = vunpack.c.l.b16 %v725
    %v990 = vunpack.c.l.b16 %v726
    %v991 = vunpack.c.l.b16 %v727
    %v992 = vunpack.c.l.b16 %v728
    %v993 = vunpack.c.l.b16 %v729
    %v994 = vunpack.c.l.b16 %v730
    %v995 = vunpack.c.l.b16 %v731
    %v996 = vunpack.c.l.b16 %v732
    %v997 = vunpack.c.l.b16 %v733
    %v998 = vunpack.c.l.b16 %v734
    %v999 = vunpack.c.l.b16 %v735
    %v1000 = vunpack.c.l.b16 %v736
    %v1001 = vunpack.c.l.b16 %v737
    %v1002 = vunpack.c.l.b16 %v738
    %v1003 = vunpack.c.l.b16 %v739
    %v1004 = vunpack.c.l.b16 %v740
    %v1005 = vunpack.c.l.b16 %v741
    %v1006 = vunpack.c.l.b16 %v742
    %v1007 = vunpack.c.l.b16 %v743
    %v1008 = vunpack.c.l.b16 %v744
    %v1009 = vunpack.c.l.b16 %v745
    %v1010 = vunpack.c.l.b16 %v746
    %v1011 = vunpack.c.l.b16 %v747
    %v1012 = vunpack.c.l.b16 %v748
    %v1013 = vunpack.c.l.b16 %v749
    %v1014 = vunpack.c.l.b16 %v750
    %v1015 = vunpack.c.l.b16 %v751
    %v1016 = vunpack.c.l.b16 %v752
    %v1017 = vunpack.c.l.b16 %v753
    %v1018 = vunpack.c.l.b16 %v754
    %v1019 = vunpack.c.l.b16 %v755
    %v1020 = vunpack.c.l.b16 %v756
    %v1021 = vunpack.c.l.b16 %v757
    %v1022 = vunpack.c.l.b16 %v758
    %v1023 = vunpack.c.l.b16 %v759
    %v1024 = vunpack.c.l.b16 %v760
    %v1025 = vunpack.c.l.b16 %v761
    %v1026 = vunpack.c.l.b16 %v762
    %v1027 = vunpack.c.l.b16 %v763
    %v1028 = vunpack.c.l.b16 %v764
    %v1029 = vunpack.c.l.b16 %v765
    %v1030 = vunpack.c.l.b16 %v766
    %v1031 = vunpack.c.l.b16 %v767
    %v1032 = vunpack.c.l.b16 %v768
    %v1033 = vunpack.c.l.b16 %v769
    %v1034 = vunpack.c.l.b16 %v770
    %v1035 = vpack.c.b16 %v908, %v907
    %v1036 = vpack.c.b16 %v910, %v909
    %v1037 = vpack.c.b16 %v912, %v911
    %v1038 = vpack.c.b16 %v914, %v913
    %v1039 = vpack.c.b16 %v916, %v915
    %v1040 = vpack.c.b16 %v918, %v917
    %v1041 = vpack.c.b16 %v920, %v919
    %v1042 = vpack.c.b16 %v922, %v921
    %v1043 = vpack.c.b16 %v924, %v923
    %v1044 = vpack.c.b16 %v926, %v925
    %v1045 = vpack.c.b16 %v928, %v927
    %v1046 = vpack.c.b16 %v930, %v929
    %v1047 = vpack.c.b16 %v932, %v931
    %v1048 = vpack.c.b16 %v934, %v933
    %v1049 = vpack.c.b16 %v936, %v935
    %v1050 = vpack.c.b16 %v938, %v937
    %v1051 = vpack.c.b16 %v940, %v939
    %v1052 = vpack.c.b16 %v942, %v941
    %v1053 = vpack.c.b16 %v944, %v943
    %v1054 = vpack.c.b16 %v946, %v945
    %v1055 = vpack.c.b16 %v948, %v947
    %v1056 = vpack.c.b16 %v950, %v949
    %v1057 = vpack.c.b16 %v952, %v951
    %v1058 = vpack.c.b16 %v954, %v953
    %v1059 = vpack.c.b16 %v956, %v955
    %v1060 = vpack.c.b16 %v958, %v957
    %v1061 = vpack.c.b16 %v960, %v959
    %v1062 = vpack.c.b16 %v962, %v961
    %v1063 = vpack.c.b16 %v964, %v963
    %v1064 = vpack.c.b16 %v966, %v965
    %v1065 = vpack.c.b16 %v968, %v967
    %v1066 = vpack.c.b16 %v970, %v969
    %v1067 = vpack.c.b16 %v972, %v971
    %v1068 = vpack.c.b16 %v974, %v973
    %v1069 = vpack.c.b16 %v976, %v975
    %v1070 = vpack.c.b16 %v978, %v977
    %v1071 = vpack.c.b16 %v980, %v979
    %v1072 = vpack.c.b16 %v982, %v981
    %v1073 = vpack.c.b16 %v984, %v983
    %v1074 = vpack.c.b16 %v986, %v985
    %v1075 = vpack.c.b16 %v988, %v987
    %v1076 = vpack.c.b16 %v990, %v989
    %v1077 = vpack.c.b16 %v992, %v991
    %v1078 = vpack.c.b16 %v994, %v993
    %v1079 = vpack.c.b16 %v996, %v995
    %v1080 = vpack.c.b16 %v998, %v997
    %v1081 = vpack.c.b16 %v1000, %v999
    %v1082 = vpack.c.b16 %v1002, %v1001
    %v1083 = vpack.c.b16 %v1004, %v1003
    %v1084 = vpack.c.b16 %v1006, %v1005
    %v1085 = vpack.c.b16 %v1008, %v1007
    %v1086 = vpack.c.b16 %v1010, %v1009
    %v1087 = vpack.c.b16 %v1012, %v1011
    %v1088 = vpack.c.b16 %v1014, %v1013
    %v1089 = vpack.c.b16 %v1016, %v1015
    %v1090 = vpack.c.b16 %v1018, %v1017
    %v1091 = vpack.c.b16 %v1020, %v1019
    %v1092 = vpack.c.b16 %v1022, %v1021
    %v1093 = vpack.c.b16 %v1024, %v1023
    %v1094 = vpack.c.b16 %v1026, %v1025
    %v1095 = vpack.c.b16 %v1028, %v1027
    %v1096 = vpack.c.b16 %v1030, %v1029
    %v1097 = vpack.c.b16 %v1032, %v1031
    %v1098 = vpack.c.b16 %v1034, %v1033
    %1163 = vmatprep.subr.bf16.mxu0 0
    %1164 = vmatpush1.bf16.msra.mxu0 %v1035
    %1165 = vmatprep.subr.bf16.mxu0 0
    %1166 = vmatpush1.bf16.msra.mxu0 %v1036
    %1167 = vmatprep.subr.bf16.mxu0 0
    %1168 = vmatpush1.bf16.msra.mxu0 %v1037
    %1169 = vmatprep.subr.bf16.mxu0 0
    %1170 = vmatpush1.bf16.msra.mxu0 %v1038
    %1171 = vmatprep.subr.bf16.mxu0 0
    %1172 = vmatpush1.bf16.msra.mxu0 %v1039
    %1173 = vmatprep.subr.bf16.mxu0 0
    %1174 = vmatpush1.bf16.msra.mxu0 %v1040
    %1175 = vmatprep.subr.bf16.mxu0 0
    %1176 = vmatpush1.bf16.msra.mxu0 %v1041
    %1177 = vmatprep.subr.bf16.mxu0 0
    %1178 = vmatpush1.bf16.msra.mxu0 %v1042
    %1179 = vmatprep.subr.bf16.mxu0 0
    %1180 = vmatpush1.bf16.msra.mxu0 %v1043
    %1181 = vmatprep.subr.bf16.mxu0 0
    %1182 = vmatpush1.bf16.msra.mxu0 %v1044
    %1183 = vmatprep.subr.bf16.mxu0 0
    %1184 = vmatpush1.bf16.msra.mxu0 %v1045
    %1185 = vmatprep.subr.bf16.mxu0 0
    %1186 = vmatpush1.bf16.msra.mxu0 %v1046
    %1187 = vmatprep.subr.bf16.mxu0 0
    %1188 = vmatpush1.bf16.msra.mxu0 %v1047
    %1189 = vmatprep.subr.bf16.mxu0 0
    %1190 = vmatpush1.bf16.msra.mxu0 %v1048
    %1191 = vmatprep.subr.bf16.mxu0 0
    %1192 = vmatpush1.bf16.msra.mxu0 %v1049
    %1193 = vmatprep.subr.bf16.mxu0 0
    %1194 = vmatpush1.bf16.msra.mxu0 %v1050
    %1195 = vmatprep.mubr.bf16.mxu0 %v772
    %1196 = vmatmul.mubr.bf16.gmra.mrb[0].mxu0 %v771
    %v1197 = vpop.f32.mrb[0].mxu0
    %v1198 = vadd.f32 0.0, %v1197
    %v1199 = vpop.f32.mrb[0].mxu0
    %v1200 = vpop.f32.mrb[0].mxu0
    %v1201 = vpop.f32.mrb[0].mxu0
    %1202 = vdwg.mxu0
    %1203 = vmatprep.subr.bf16.mxu0 0
    %1204 = vmatpush1.bf16.msra.mxu0 %v1051
    %1205 = vmatprep.subr.bf16.mxu0 0
    %1206 = vmatpush1.bf16.msra.mxu0 %v1052
    %1207 = vmatprep.subr.bf16.mxu0 0
    %1208 = vmatpush1.bf16.msra.mxu0 %v1053
    %1209 = vmatprep.subr.bf16.mxu0 0
    %1210 = vmatpush1.bf16.msra.mxu0 %v1054
    %1211 = vmatprep.subr.bf16.mxu0 0
    %1212 = vmatpush1.bf16.msra.mxu0 %v1055
    %1213 = vmatprep.subr.bf16.mxu0 0
    %1214 = vmatpush1.bf16.msra.mxu0 %v1056
    %1215 = vmatprep.subr.bf16.mxu0 0
    %1216 = vmatpush1.bf16.msra.mxu0 %v1057
    %1217 = vmatprep.subr.bf16.mxu0 0
    %1218 = vmatpush1.bf16.msra.mxu0 %v1058
    %1219 = vmatprep.subr.bf16.mxu0 0
    %1220 = vmatpush1.bf16.msra.mxu0 %v1059
    %1221 = vmatprep.subr.bf16.mxu0 0
    %1222 = vmatpush1.bf16.msra.mxu0 %v1060
    %1223 = vmatprep.subr.bf16.mxu0 0
    %1224 = vmatpush1.bf16.msra.mxu0 %v1061
    %1225 = vmatprep.subr.bf16.mxu0 0
    %1226 = vmatpush1.bf16.msra.mxu0 %v1062
    %1227 = vmatprep.subr.bf16.mxu0 0
    %1228 = vmatpush1.bf16.msra.mxu0 %v1063
    %1229 = vmatprep.subr.bf16.mxu0 0
    %1230 = vmatpush1.bf16.msra.mxu0 %v1064
    %1231 = vmatprep.subr.bf16.mxu0 0
    %1232 = vmatpush1.bf16.msra.mxu0 %v1065
    %1233 = vmatprep.subr.bf16.mxu0 0
    %1234 = vmatpush1.bf16.msra.mxu0 %v1066
    %1235 = vmatprep.mubr.bf16.mxu0 %v774
    %1236 = vmatmul.mubr.bf16.gmra.mrb[0].mxu0 %v773
    %v1237 = vpop.f32.mrb[0].mxu0
    %v1238 = vadd.f32 %v1198, %v1237
    %v1239 = vpop.f32.mrb[0].mxu0
    %v1240 = vpop.f32.mrb[0].mxu0
    %v1241 = vpop.f32.mrb[0].mxu0
    %1242 = vdwg.mxu0
    %1243 = vmatprep.subr.bf16.mxu0 0
    %1244 = vmatpush1.bf16.msra.mxu0 %v1067
    %1245 = vmatprep.subr.bf16.mxu0 0
    %1246 = vmatpush1.bf16.msra.mxu0 %v1068
    %1247 = vmatprep.subr.bf16.mxu0 0
    %1248 = vmatpush1.bf16.msra.mxu0 %v1069
    %1249 = vmatprep.subr.bf16.mxu0 0
    %1250 = vmatpush1.bf16.msra.mxu0 %v1070
    %1251 = vmatprep.subr.bf16.mxu0 0
    %1252 = vmatpush1.bf16.msra.mxu0 %v1071
    %1253 = vmatprep.subr.bf16.mxu0 0
    %1254 = vmatpush1.bf16.msra.mxu0 %v1072
    %1255 = vmatprep.subr.bf16.mxu0 0
    %1256 = vmatpush1.bf16.msra.mxu0 %v1073
    %1257 = vmatprep.subr.bf16.mxu0 0
    %1258 = vmatpush1.bf16.msra.mxu0 %v1074
    %1259 = vmatprep.subr.bf16.mxu0 0
    %1260 = vmatpush1.bf16.msra.mxu0 %v1075
    %1261 = vmatprep.subr.bf16.mxu0 0
    %1262 = vmatpush1.bf16.msra.mxu0 %v1076
    %1263 = vmatprep.subr.bf16.mxu0 0
    %1264 = vmatpush1.bf16.msra.mxu0 %v1077
    %1265 = vmatprep.subr.bf16.mxu0 0
    %1266 = vmatpush1.bf16.msra.mxu0 %v1078
    %1267 = vmatprep.subr.bf16.mxu0 0
    %1268 = vmatpush1.bf16.msra.mxu0 %v1079
    %1269 = vmatprep.subr.bf16.mxu0 0
    %1270 = vmatpush1.bf16.msra.mxu0 %v1080
    %1271 = vmatprep.subr.bf16.mxu0 0
    %1272 = vmatpush1.bf16.msra.mxu0 %v1081
    %1273 = vmatprep.subr.bf16.mxu0 0
    %1274 = vmatpush1.bf16.msra.mxu0 %v1082
    %1275 = vmatprep.mubr.bf16.mxu0 %v776
    %1276 = vmatmul.mubr.bf16.gmra.mrb[0].mxu0 %v775
    %v1277 = vpop.f32.mrb[0].mxu0
    %v1278 = vadd.f32 %v1238, %v1277
    %v1279 = vpop.f32.mrb[0].mxu0
    %v1280 = vpop.f32.mrb[0].mxu0
    %v1281 = vpop.f32.mrb[0].mxu0
    %1282 = vdwg.mxu0
    %1283 = vmatprep.subr.bf16.mxu0 0
    %1284 = vmatpush1.bf16.msra.mxu0 %v1083
    %1285 = vmatprep.subr.bf16.mxu0 0
    %1286 = vmatpush1.bf16.msra.mxu0 %v1084
    %1287 = vmatprep.subr.bf16.mxu0 0
    %1288 = vmatpush1.bf16.msra.mxu0 %v1085
    %1289 = vmatprep.subr.bf16.mxu0 0
    %1290 = vmatpush1.bf16.msra.mxu0 %v1086
    %1291 = vmatprep.subr.bf16.mxu0 0
    %1292 = vmatpush1.bf16.msra.mxu0 %v1087
    %1293 = vmatprep.subr.bf16.mxu0 0
    %1294 = vmatpush1.bf16.msra.mxu0 %v1088
    %1295 = vmatprep.subr.bf16.mxu0 0
    %1296 = vmatpush1.bf16.msra.mxu0 %v1089
    %1297 = vmatprep.subr.bf16.mxu0 0
    %1298 = vmatpush1.bf16.msra.mxu0 %v1090
    %1299 = vmatprep.subr.bf16.mxu0 0
    %1300 = vmatpush1.bf16.msra.mxu0 %v1091
    %1301 = vmatprep.subr.bf16.mxu0 0
    %1302 = vmatpush1.bf16.msra.mxu0 %v1092
    %1303 = vmatprep.subr.bf16.mxu0 0
    %1304 = vmatpush1.bf16.msra.mxu0 %v1093
    %1305 = vmatprep.subr.bf16.mxu0 0
    %1306 = vmatpush1.bf16.msra.mxu0 %v1094
    %1307 = vmatprep.subr.bf16.mxu0 0
    %1308 = vmatpush1.bf16.msra.mxu0 %v1095
    %1309 = vmatprep.subr.bf16.mxu0 0
    %1310 = vmatpush1.bf16.msra.mxu0 %v1096
    %1311 = vmatprep.subr.bf16.mxu0 0
    %1312 = vmatpush1.bf16.msra.mxu0 %v1097
    %1313 = vmatprep.subr.bf16.mxu0 0
    %1314 = vmatpush1.bf16.msra.mxu0 %v1098
    %1315 = vmatprep.mubr.bf16.mxu0 %v778
    %1316 = vmatmul.mubr.bf16.gmra.mrb[0].mxu0 %v777
    %v1317 = vpop.f32.mrb[0].mxu0
    %v1318 = vadd.f32 %v1278, %v1317
    %v1319 = vpop.f32.mrb[0].mxu0
    %v1320 = vpop.f32.mrb[0].mxu0
    %v1321 = vpop.f32.mrb[0].mxu0
    %1322 = vdwg.mxu0
    %v1323 = vsel %vm365, %v1318, 0.0
    %v1324 = vrot.slane %v1323, 4
    %v1325 = vadd.f32 %v1323, %v1324
    %v1326 = vrot.slane %v1325, 2
    %v1327 = vadd.f32 %v1325, %v1326
    %v1328 = vrot.slane %v1327, 1
    %v1329 = vadd.f32 %v1327, %v1328
    %v1330 = vmul.f32 %v1329, %v422
    %v1331 = vsub.f32 %v1318, %v1330
    %v1332 = vmul.f32 %v1331, %v1331
    %v1333 = vsel %vm365, %v1332, 0.0
    %v1334 = vrot.slane %v1333, 4
    %v1335 = vadd.f32 %v1333, %v1334
    %v1336 = vrot.slane %v1335, 2
    %v1337 = vadd.f32 %v1335, %v1336
    %v1338 = vrot.slane %v1337, 1
    %v1339 = vadd.f32 %v1337, %v1338
    %v1340 = vmul.f32 %v1339, %v422
    %v1341 = vadd.f32 %v1340, 1e-05
    %v1342 = vrsqrt.pop %v1341
    %v1343 = vmul.f32 %v1331, %v1342
    %v1344 = vld [vmem:[%s9 + $0x10] sm:$0x1]
    %v1346 = vlaneseq
    %v1347 = vshrl.u32 %v1346, 7
    %v1348 = vsub.s32 0, %v1347
    %v1349 = vrot.slane %v1344, %v1348
    %v1351 = vmul.f32 %v1343, %v1349
    %v1352 = vld [vmem:[%s9 + $0x11] sm:$0x1]
    %v1354 = vlaneseq
    %v1355 = vshrl.u32 %v1354, 7
    %v1356 = vsub.s32 0, %v1355
    %v1357 = vrot.slane %v1352, %v1356
    %v1359 = vadd.f32 %v1351, %v1357
    %v1360 = vmax.f32 %v1359, 0.0
    %v1361 = vld [vmem:[%s1] sm:$0x3]
    %v1362 = vld [vmem:[#allocation8] sm:$0xff]
    %v1363 = vld [vmem:[#allocation8 + $0x8] sm:$0xf]
    %v1364 = vld [vmem:[#allocation8 + $0xc] sm:$0xff]
    %v1365 = vld [vmem:[#allocation8 + $0x14] sm:$0xf]
    %v1366 = vld [vmem:[#allocation8 + $0x18] sm:$0xff]
    %v1367 = vld [vmem:[#allocation8 + $0x20] sm:$0xf]
    %v1368 = vld [vmem:[#allocation8 + $0x24] sm:$0xff]
    %v1369 = vld [vmem:[#allocation8 + $0x2c] sm:$0xf]
    %v1370 = vld [vmem:[#allocation8 + $0x30] sm:$0xff]
    %v1371 = vld [vmem:[#allocation8 + $0x38] sm:$0xf]
    %v1372 = vld [vmem:[#allocation8 + $0x3c] sm:$0xff]
    %v1373 = vld [vmem:[#allocation8 + $0x44] sm:$0xf]
    %v1374 = vld [vmem:[#allocation8 + $0x48] sm:$0xff]
    %v1375 = vld [vmem:[#allocation8 + $0x50] sm:$0xf]
    %v1376 = vld [vmem:[#allocation8 + $0x54] sm:$0xff]
    %v1377 = vld [vmem:[#allocation8 + $0x5c] sm:$0xf]
    %v1378 = vld [vmem:[#allocation8 + $0x60] sm:$0xff]
    %v1379 = vld [vmem:[#allocation8 + $0x68] sm:$0xf]
    %v1380 = vld [vmem:[#allocation8 + $0x6c] sm:$0xff]
    %v1381 = vld [vmem:[#allocation8 + $0x74] sm:$0xf]
    %v1382 = vld [vmem:[#allocation8 + $0x78] sm:$0xff]
    %v1383 = vld [vmem:[#allocation8 + $0x80] sm:$0xf]
    %v1384 = vld [vmem:[#allocation8 + $0x84] sm:$0xff]
    %v1385 = vld [vmem:[#allocation8 + $0x8c] sm:$0xf]
    %v1386 = vld [vmem:[#allocation8 + $0x90] sm:$0xff]
    %v1387 = vld [vmem:[#allocation8 + $0x98] sm:$0xf]
    %v1388 = vld [vmem:[#allocation8 + $0x9c] sm:$0xff]
    %v1389 = vld [vmem:[#allocation8 + $0xa4] sm:$0xf]
    %v1390 = vld [vmem:[#allocation8 + $0xa8] sm:$0xff]
    %v1391 = vld [vmem:[#allocation8 + $0xb0] sm:$0xf]
    %v1392 = vld [vmem:[#allocation8 + $0xb4] sm:$0xff]
    %v1393 = vld [vmem:[#allocation8 + $0xbc] sm:$0xf]
    %v1394 = vpack.c.bf16 %v1360, %v1360
    %v1427 = vunpack.c.l.b16 %v1362
    %v1428 = vunpack.c.h.b16 %v1362
    %v1429 = vunpack.c.l.b16 %v1363
    %v1430 = vunpack.c.l.b16 %v1364
    %v1431 = vunpack.c.h.b16 %v1364
    %v1432 = vunpack.c.l.b16 %v1365
    %v1433 = vunpack.c.l.b16 %v1366
    %v1434 = vunpack.c.h.b16 %v1366
    %v1435 = vunpack.c.l.b16 %v1367
    %v1436 = vunpack.c.l.b16 %v1368
    %v1437 = vunpack.c.h.b16 %v1368
    %v1438 = vunpack.c.l.b16 %v1369
    %v1439 = vunpack.c.l.b16 %v1370
    %v1440 = vunpack.c.h.b16 %v1370
    %v1441 = vunpack.c.l.b16 %v1371
    %v1442 = vunpack.c.l.b16 %v1372
    %v1443 = vunpack.c.h.b16 %v1372
    %v1444 = vunpack.c.l.b16 %v1373
    %v1445 = vunpack.c.l.b16 %v1374
    %v1446 = vunpack.c.h.b16 %v1374
    %v1447 = vunpack.c.l.b16 %v1375
    %v1448 = vunpack.c.l.b16 %v1376
    %v1449 = vunpack.c.h.b16 %v1376
    %v1450 = vunpack.c.l.b16 %v1377
    %v1451 = vunpack.c.l.b16 %v1378
    %v1452 = vunpack.c.h.b16 %v1378
    %v1453 = vunpack.c.l.b16 %v1379
    %v1454 = vunpack.c.l.b16 %v1380
    %v1455 = vunpack.c.h.b16 %v1380
    %v1456 = vunpack.c.l.b16 %v1381
    %v1457 = vunpack.c.l.b16 %v1382
    %v1458 = vunpack.c.h.b16 %v1382
    %v1459 = vunpack.c.l.b16 %v1383
    %v1460 = vunpack.c.l.b16 %v1384
    %v1461 = vunpack.c.h.b16 %v1384
    %v1462 = vunpack.c.l.b16 %v1385
    %v1463 = vunpack.c.l.b16 %v1386
    %v1464 = vunpack.c.h.b16 %v1386
    %v1465 = vunpack.c.l.b16 %v1387
    %v1466 = vunpack.c.l.b16 %v1388
    %v1467 = vunpack.c.h.b16 %v1388
    %v1468 = vunpack.c.l.b16 %v1389
    %v1469 = vunpack.c.l.b16 %v1390
    %v1470 = vunpack.c.h.b16 %v1390
    %v1471 = vunpack.c.l.b16 %v1391
    %v1472 = vunpack.c.l.b16 %v1392
    %v1473 = vunpack.c.h.b16 %v1392
    %v1474 = vunpack.c.l.b16 %v1393
    %v1475 = vpack.c.b16 %v1430, %v1427
    %v1476 = vpack.c.b16 %v1431, %v1428
    %v1477 = vpack.c.b16 %v1432, %v1429
    %v1478 = vpack.c.b16 %v1436, %v1433
    %v1479 = vpack.c.b16 %v1437, %v1434
    %v1480 = vpack.c.b16 %v1438, %v1435
    %v1481 = vpack.c.b16 %v1442, %v1439
    %v1482 = vpack.c.b16 %v1443, %v1440
    %v1483 = vpack.c.b16 %v1444, %v1441
    %v1484 = vpack.c.b16 %v1448, %v1445
    %v1485 = vpack.c.b16 %v1449, %v1446
    %v1486 = vpack.c.b16 %v1450, %v1447
    %v1487 = vpack.c.b16 %v1454, %v1451
    %v1488 = vpack.c.b16 %v1455, %v1452
    %v1489 = vpack.c.b16 %v1456, %v1453
    %v1490 = vpack.c.b16 %v1460, %v1457
    %v1491 = vpack.c.b16 %v1461, %v1458
    %v1492 = vpack.c.b16 %v1462, %v1459
    %v1493 = vpack.c.b16 %v1466, %v1463
    %v1494 = vpack.c.b16 %v1467, %v1464
    %v1495 = vpack.c.b16 %v1468, %v1465
    %v1496 = vpack.c.b16 %v1472, %v1469
    %v1497 = vpack.c.b16 %v1473, %v1470
    %v1498 = vpack.c.b16 %v1474, %v1471
    %1523 = vmatprep.subr.bf16.mxu0 %v1476
    %1524 = vmatpush1.bf16.msra.mxu0 %v1475
    %1525 = vmatprep.subr.bf16.mxu0 %v1479
    %1526 = vmatpush1.bf16.msra.mxu0 %v1478
    %1527 = vmatprep.subr.bf16.mxu0 %v1482
    %1528 = vmatpush1.bf16.msra.mxu0 %v1481
    %1529 = vmatprep.subr.bf16.mxu0 %v1485
    %1530 = vmatpush1.bf16.msra.mxu0 %v1484
    %1531 = vmatprep.subr.bf16.mxu0 %v1488
    %1532 = vmatpush1.bf16.msra.mxu0 %v1487
    %1533 = vmatprep.subr.bf16.mxu0 %v1491
    %1534 = vmatpush1.bf16.msra.mxu0 %v1490
    %1535 = vmatprep.subr.bf16.mxu0 %v1494
    %1536 = vmatpush1.bf16.msra.mxu0 %v1493
    %1537 = vmatprep.subr.bf16.mxu0 %v1497
    %1538 = vmatpush1.bf16.msra.mxu0 %v1496
    %1539 = vmatprep.subr.bf16.mxu0 0
    %1540 = vmatpush1.bf16.msra.mxu0 0
    %1541 = vmatprep.subr.bf16.mxu0 0
    %1542 = vmatpush1.bf16.msra.mxu0 0
    %1543 = vmatprep.subr.bf16.mxu0 0
    %1544 = vmatpush1.bf16.msra.mxu0 0
    %1545 = vmatprep.subr.bf16.mxu0 0
    %1546 = vmatpush1.bf16.msra.mxu0 0
    %1547 = vmatprep.subr.bf16.mxu0 0
    %1548 = vmatpush1.bf16.msra.mxu0 0
    %1549 = vmatprep.subr.bf16.mxu0 0
    %1550 = vmatpush1.bf16.msra.mxu0 0
    %1551 = vmatprep.subr.bf16.mxu0 0
    %1552 = vmatpush1.bf16.msra.mxu0 0
    %1553 = vmatprep.subr.bf16.mxu0 0
    %1554 = vmatpush1.bf16.msra.mxu0 0
    %1555 = vmatprep.mubr.bf16.mxu0 0
    %1556 = vmatmul.mubr.bf16.gmra.mrb[0].mxu0 %v1394
    %v1557 = vpop.f32.mrb[0].mxu0
    %v1558 = vadd.f32 0.0, %v1557
    %v1559 = vpop.f32.mrb[0].mxu0
    %v1560 = vadd.f32 0.0, %v1559
    %v1561 = vpop.f32.mrb[0].mxu0
    %v1562 = vpop.f32.mrb[0].mxu0
    %1563 = vdwg.mxu0
    %1564 = vmatprep.subr.bf16.mxu0 0
    %1565 = vmatpush1.bf16.msra.mxu0 %v1477
    %1566 = vmatprep.subr.bf16.mxu0 0
    %1567 = vmatpush1.bf16.msra.mxu0 %v1480
    %1568 = vmatprep.subr.bf16.mxu0 0
    %1569 = vmatpush1.bf16.msra.mxu0 %v1483
    %1570 = vmatprep.subr.bf16.mxu0 0
    %1571 = vmatpush1.bf16.msra.mxu0 %v1486
    %1572 = vmatprep.subr.bf16.mxu0 0
    %1573 = vmatpush1.bf16.msra.mxu0 %v1489
    %1574 = vmatprep.subr.bf16.mxu0 0
    %1575 = vmatpush1.bf16.msra.mxu0 %v1492
    %1576 = vmatprep.subr.bf16.mxu0 0
    %1577 = vmatpush1.bf16.msra.mxu0 %v1495
    %1578 = vmatprep.subr.bf16.mxu0 0
    %1579 = vmatpush1.bf16.msra.mxu0 %v1498
    %1580 = vmatprep.subr.bf16.mxu0 0
    %1581 = vmatpush1.bf16.msra.mxu0 0
    %1582 = vmatprep.subr.bf16.mxu0 0
    %1583 = vmatpush1.bf16.msra.mxu0 0
    %1584 = vmatprep.subr.bf16.mxu0 0
    %1585 = vmatpush1.bf16.msra.mxu0 0
    %1586 = vmatprep.subr.bf16.mxu0 0
    %1587 = vmatpush1.bf16.msra.mxu0 0
    %1588 = vmatprep.subr.bf16.mxu0 0
    %1589 = vmatpush1.bf16.msra.mxu0 0
    %1590 = vmatprep.subr.bf16.mxu0 0
    %1591 = vmatpush1.bf16.msra.mxu0 0
    %1592 = vmatprep.subr.bf16.mxu0 0
    %1593 = vmatpush1.bf16.msra.mxu0 0
    %1594 = vmatprep.subr.bf16.mxu0 0
    %1595 = vmatpush1.bf16.msra.mxu0 0
    %1596 = vmatprep.mubr.bf16.mxu0 0
    %1597 = vmatmul.mubr.bf16.gmra.mrb[0].mxu0 %v1394
    %v1598 = vpop.f32.mrb[0].mxu0
    %v1599 = vadd.f32 0.0, %v1598
    %v1600 = vpop.f32.mrb[0].mxu0
    %v1601 = vpop.f32.mrb[0].mxu0
    %v1602 = vpop.f32.mrb[0].mxu0
    %1603 = vdwg.mxu0
    %v1604 = vld [vmem:[#allocation10] sm:$0xff]
    %v1605 = vld [vmem:[#allocation10 + $0x8] sm:$0xf]
    %v1606 = vld [vmem:[#allocation10 + $0xc] sm:$0xff]
    %v1607 = vld [vmem:[#allocation10 + $0x14] sm:$0xf]
    %v1608 = vld [vmem:[#allocation10 + $0x18] sm:$0xff]
    %v1609 = vld [vmem:[#allocation10 + $0x20] sm:$0xf]
    %v1610 = vld [vmem:[#allocation10 + $0x24] sm:$0xff]
    %v1611 = vld [vmem:[#allocation10 + $0x2c] sm:$0xf]
    %v1612 = vld [vmem:[#allocation10 + $0x30] sm:$0xff]
    %v1613 = vld [vmem:[#allocation10 + $0x38] sm:$0xf]
    %v1614 = vld [vmem:[#allocation10 + $0x3c] sm:$0xff]
    %v1615 = vld [vmem:[#allocation10 + $0x44] sm:$0xf]
    %v1616 = vld [vmem:[#allocation10 + $0x48] sm:$0xff]
    %v1617 = vld [vmem:[#allocation10 + $0x50] sm:$0xf]
    %v1618 = vld [vmem:[#allocation10 + $0x54] sm:$0xff]
    %v1619 = vld [vmem:[#allocation10 + $0x5c] sm:$0xf]
    %v1620 = vld [vmem:[#allocation10 + $0x60] sm:$0xff]
    %v1621 = vld [vmem:[#allocation10 + $0x68] sm:$0xf]
    %v1622 = vld [vmem:[#allocation10 + $0x6c] sm:$0xff]
    %v1623 = vld [vmem:[#allocation10 + $0x74] sm:$0xf]
    %v1624 = vld [vmem:[#allocation10 + $0x78] sm:$0xff]
    %v1625 = vld [vmem:[#allocation10 + $0x80] sm:$0xf]
    %v1626 = vld [vmem:[#allocation10 + $0x84] sm:$0xff]
    %v1627 = vld [vmem:[#allocation10 + $0x8c] sm:$0xf]
    %v1628 = vld [vmem:[#allocation10 + $0x90] sm:$0xff]
    %v1629 = vld [vmem:[#allocation10 + $0x98] sm:$0xf]
    %v1630 = vld [vmem:[#allocation10 + $0x9c] sm:$0xff]
    %v1631 = vld [vmem:[#allocation10 + $0xa4] sm:$0xf]
    %v1632 = vld [vmem:[#allocation10 + $0xa8] sm:$0xff]
    %v1633 = vld [vmem:[#allocation10 + $0xb0] sm:$0xf]
    %v1634 = vld [vmem:[#allocation10 + $0xb4] sm:$0xff]
    %v1635 = vld [vmem:[#allocation10 + $0xbc] sm:$0xf]
    %v1636 = vpack.c.bf16 %v1361, %v1361
    %v1669 = vunpack.c.l.b16 %v1604
    %v1670 = vunpack.c.h.b16 %v1604
    %v1671 = vunpack.c.l.b16 %v1605
    %v1672 = vunpack.c.l.b16 %v1606
    %v1673 = vunpack.c.h.b16 %v1606
    %v1674 = vunpack.c.l.b16 %v1607
    %v1675 = vunpack.c.l.b16 %v1608
    %v1676 = vunpack.c.h.b16 %v1608
    %v1677 = vunpack.c.l.b16 %v1609
    %v1678 = vunpack.c.l.b16 %v1610
    %v1679 = vunpack.c.h.b16 %v1610
    %v1680 = vunpack.c.l.b16 %v1611
    %v1681 = vunpack.c.l.b16 %v1612
    %v1682 = vunpack.c.h.b16 %v1612
    %v1683 = vunpack.c.l.b16 %v1613
    %v1684 = vunpack.c.l.b16 %v1614
    %v1685 = vunpack.c.h.b16 %v1614
    %v1686 = vunpack.c.l.b16 %v1615
    %v1687 = vunpack.c.l.b16 %v1616
    %v1688 = vunpack.c.h.b16 %v1616
    %v1689 = vunpack.c.l.b16 %v1617
    %v1690 = vunpack.c.l.b16 %v1618
    %v1691 = vunpack.c.h.b16 %v1618
    %v1692 = vunpack.c.l.b16 %v1619
    %v1693 = vunpack.c.l.b16 %v1620
    %v1694 = vunpack.c.h.b16 %v1620
    %v1695 = vunpack.c.l.b16 %v1621
    %v1696 = vunpack.c.l.b16 %v1622
    %v1697 = vunpack.c.h.b16 %v1622
    %v1698 = vunpack.c.l.b16 %v1623
    %v1699 = vunpack.c.l.b16 %v1624
    %v1700 = vunpack.c.h.b16 %v1624
    %v1701 = vunpack.c.l.b16 %v1625
    %v1702 = vunpack.c.l.b16 %v1626
    %v1703 = vunpack.c.h.b16 %v1626
    %v1704 = vunpack.c.l.b16 %v1627
    %v1705 = vunpack.c.l.b16 %v1628
    %v1706 = vunpack.c.h.b16 %v1628
    %v1707 = vunpack.c.l.b16 %v1629
    %v1708 = vunpack.c.l.b16 %v1630
    %v1709 = vunpack.c.h.b16 %v1630
    %v1710 = vunpack.c.l.b16 %v1631
    %v1711 = vunpack.c.l.b16 %v1632
    %v1712 = vunpack.c.h.b16 %v1632
    %v1713 = vunpack.c.l.b16 %v1633
    %v1714 = vunpack.c.l.b16 %v1634
    %v1715 = vunpack.c.h.b16 %v1634
    %v1716 = vunpack.c.l.b16 %v1635
    %v1717 = vpack.c.b16 %v1672, %v1669
    %v1718 = vpack.c.b16 %v1673, %v1670
    %v1719 = vpack.c.b16 %v1674, %v1671
    %v1720 = vpack.c.b16 %v1678, %v1675
    %v1721 = vpack.c.b16 %v1679, %v1676
    %v1722 = vpack.c.b16 %v1680, %v1677
    %v1723 = vpack.c.b16 %v1684, %v1681
    %v1724 = vpack.c.b16 %v1685, %v1682
    %v1725 = vpack.c.b16 %v1686, %v1683
    %v1726 = vpack.c.b16 %v1690, %v1687
    %v1727 = vpack.c.b16 %v1691, %v1688
    %v1728 = vpack.c.b16 %v1692, %v1689
    %v1729 = vpack.c.b16 %v1696, %v1693
    %v1730 = vpack.c.b16 %v1697, %v1694
    %v1731 = vpack.c.b16 %v1698, %v1695
    %v1732 = vpack.c.b16 %v1702, %v1699
    %v1733 = vpack.c.b16 %v1703, %v1700
    %v1734 = vpack.c.b16 %v1704, %v1701
    %v1735 = vpack.c.b16 %v1708, %v1705
    %v1736 = vpack.c.b16 %v1709, %v1706
    %v1737 = vpack.c.b16 %v1710, %v1707
    %v1738 = vpack.c.b16 %v1714, %v1711
    %v1739 = vpack.c.b16 %v1715, %v1712
    %v1740 = vpack.c.b16 %v1716, %v1713
    %1765 = vmatprep.subr.bf16.mxu0 %v1718
    %1766 = vmatpush1.bf16.msra.mxu0 %v1717
    %1767 = vmatprep.subr.bf16.mxu0 %v1721
    %1768 = vmatpush1.bf16.msra.mxu0 %v1720
    %1769 = vmatprep.subr.bf16.mxu0 %v1724
    %1770 = vmatpush1.bf16.msra.mxu0 %v1723
    %1771 = vmatprep.subr.bf16.mxu0 %v1727
    %1772 = vmatpush1.bf16.msra.mxu0 %v1726
    %1773 = vmatprep.subr.bf16.mxu0 %v1730
    %1774 = vmatpush1.bf16.msra.mxu0 %v1729
    %1775 = vmatprep.subr.bf16.mxu0 %v1733
    %1776 = vmatpush1.bf16.msra.mxu0 %v1732
    %1777 = vmatprep.subr.bf16.mxu0 %v1736
    %1778 = vmatpush1.bf16.msra.mxu0 %v1735
    %1779 = vmatprep.subr.bf16.mxu0 %v1739
    %1780 = vmatpush1.bf16.msra.mxu0 %v1738
    %1781 = vmatprep.subr.bf16.mxu0 0
    %1782 = vmatpush1.bf16.msra.mxu0 0
    %1783 = vmatprep.subr.bf16.mxu0 0
    %1784 = vmatpush1.bf16.msra.mxu0 0
    %1785 = vmatprep.subr.bf16.mxu0 0
    %1786 = vmatpush1.bf16.msra.mxu0 0
    %1787 = vmatprep.subr.bf16.mxu0 0
    %1788 = vmatpush1.bf16.msra.mxu0 0
    %1789 = vmatprep.subr.bf16.mxu0 0
    %1790 = vmatpush1.bf16.msra.mxu0 0
    %1791 = vmatprep.subr.bf16.mxu0 0
    %1792 = vmatpush1.bf16.msra.mxu0 0
    %1793 = vmatprep.subr.bf16.mxu0 0
    %1794 = vmatpush1.bf16.msra.mxu0 0
    %1795 = vmatprep.subr.bf16.mxu0 0
    %1796 = vmatpush1.bf16.msra.mxu0 0
    %1797 = vmatprep.mubr.bf16.mxu0 0
    %1798 = vmatmul.mubr.bf16.gmra.mrb[0].mxu0 %v1636
    %v1799 = vpop.f32.mrb[0].mxu0
    %v1800 = vadd.f32 0.0, %v1799
    %v1801 = vpop.f32.mrb[0].mxu0
    %v1802 = vadd.f32 0.0, %v1801
    %v1803 = vpop.f32.mrb[0].mxu0
    %v1804 = vpop.f32.mrb[0].mxu0
    %1805 = vdwg.mxu0
    %1806 = vmatprep.subr.bf16.mxu0 0
    %1807 = vmatpush1.bf16.msra.mxu0 %v1719
    %1808 = vmatprep.subr.bf16.mxu0 0
    %1809 = vmatpush1.bf16.msra.mxu0 %v1722
    %1810 = vmatprep.subr.bf16.mxu0 0
    %1811 = vmatpush1.bf16.msra.mxu0 %v1725
    %1812 = vmatprep.subr.bf16.mxu0 0
    %1813 = vmatpush1.bf16.msra.mxu0 %v1728
    %1814 = vmatprep.subr.bf16.mxu0 0
    %1815 = vmatpush1.bf16.msra.mxu0 %v1731
    %1816 = vmatprep.subr.bf16.mxu0 0
    %1817 = vmatpush1.bf16.msra.mxu0 %v1734
    %1818 = vmatprep.subr.bf16.mxu0 0
    %1819 = vmatpush1.bf16.msra.mxu0 %v1737
    %1820 = vmatprep.subr.bf16.mxu0 0
    %1821 = vmatpush1.bf16.msra.mxu0 %v1740
    %1822 = vmatprep.subr.bf16.mxu0 0
    %1823 = vmatpush1.bf16.msra.mxu0 0
    %1824 = vmatprep.subr.bf16.mxu0 0
    %1825 = vmatpush1.bf16.msra.mxu0 0
    %1826 = vmatprep.subr.bf16.mxu0 0
    %1827 = vmatpush1.bf16.msra.mxu0 0
    %1828 = vmatprep.subr.bf16.mxu0 0
    %1829 = vmatpush1.bf16.msra.mxu0 0
    %1830 = vmatprep.subr.bf16.mxu0 0
    %1831 = vmatpush1.bf16.msra.mxu0 0
    %1832 = vmatprep.subr.bf16.mxu0 0
    %1833 = vmatpush1.bf16.msra.mxu0 0
    %1834 = vmatprep.subr.bf16.mxu0 0
    %1835 = vmatpush1.bf16.msra.mxu0 0
    %1836 = vmatprep.subr.bf16.mxu0 0
    %1837 = vmatpush1.bf16.msra.mxu0 0
    %1838 = vmatprep.mubr.bf16.mxu0 0
    %1839 = vmatmul.mubr.bf16.gmra.mrb[0].mxu0 %v1636
    %v1840 = vpop.f32.mrb[0].mxu0
    %v1841 = vadd.f32 0.0, %v1840
    %v1842 = vpop.f32.mrb[0].mxu0
    %v1843 = vpop.f32.mrb[0].mxu0
    %v1844 = vpop.f32.mrb[0].mxu0
    %1845 = vdwg.mxu0
    %v1846 = vadd.f32 %v1558, %v1800
    %v1847 = vadd.f32 %v1560, %v1802
    %v1848 = vld [vmem:[%s9 + $0x12] sm:$0x3]
    %v1850 = vlaneseq
    %v1851 = vshrl.u32 %v1850, 7
    %v1852 = vsub.s32 0, %v1851
    %v1853 = vrot.slane %v1848, %v1852
    %v1854 = vlaneseq
    %v1855 = vshrl.u32 %v1854, 7
    %v1856 = vsub.s32 1, %v1855
    %v1857 = vrot.slane %v1848, %v1856
    %v1860 = vadd.f32 %v1846, %v1853
    %v1861 = vadd.f32 %v1847, %v1857
    %v1862 = vxor.u32 %v1860, 2147483648
    %v1863 = vxor.u32 %v1861, 2147483648
    %v1864 = vmul.f32 %v1862, 1.442695
    %v1865 = vpow.pop %v1864
    %v1866 = vmul.f32 %v1863, 1.442695
    %v1867 = vpow.pop %v1866
    %v1868 = vadd.f32 %v1865, 1.0
    %v1869 = vadd.f32 %v1867, 1.0
    %v1870 = vrcp.pop %v1868
    %v1871 = vmul.f32 1.0, %v1870
    %v1872 = vrcp.pop %v1869
    %v1873 = vmul.f32 1.0, %v1872
    %v1874 = vld [vmem:[%s9 + $0x14] sm:$0x1]
    %v1876 = vlaneseq
    %v1877 = vshrl.u32 %v1876, 7
    %v1878 = vsub.s32 0, %v1877
    %v1879 = vrot.slane %v1874, %v1878
    %v1881 = vadd.f32 %v1599, %v1879
    %v1882 = vld [vmem:[%s9 + $0x15] sm:$0x1]
    %v1884 = vlaneseq
    %v1885 = vshrl.u32 %v1884, 7
    %v1886 = vsub.s32 0, %v1885
    %v1887 = vrot.slane %v1882, %v1886
    %v1889 = vadd.f32 %v1841, %v1887
    %v1890 = vmul.f32 %v1871, %v1889
    %v1891 = vadd.f32 %v1881, %v1890
    %v1892 = vtanh.pop %v1891
    %v1893 = vsub.f32 1.0, %v1873
    %v1894 = vmul.f32 %v1893, %v1892
    %v1895 = vmul.f32 %v1873, %v1361
    %v1896 = vadd.f32 %v1894, %v1895
    %1897 = vst [vmem:[#allocation17] sm:$0x3] %v1896
    %v1898 = vld [vmem:[#allocation11] sm:$0xff]
    %v1899 = vld [vmem:[#allocation11 + $0x8] sm:$0xff]
    %v1900 = vld [vmem:[#allocation11 + $0x10] sm:$0xff]
    %v1901 = vld [vmem:[#allocation11 + $0x18] sm:$0xff]
    %v1902 = vld [vmem:[#allocation11 + $0x20] sm:$0xff]
    %v1903 = vld [vmem:[#allocation11 + $0x28] sm:$0xff]
    %v1904 = vld [vmem:[#allocation11 + $0x30] sm:$0xff]
    %v1905 = vld [vmem:[#allocation11 + $0x38] sm:$0xff]
    %v1906 = vld [vmem:[#allocation11 + $0x40] sm:$0xff]
    %v1907 = vld [vmem:[#allocation11 + $0x48] sm:$0xff]
    %v1908 = vld [vmem:[#allocation11 + $0x50] sm:$0xff]
    %v1909 = vld [vmem:[#allocation11 + $0x58] sm:$0xff]
    %v1910 = vld [vmem:[#allocation11 + $0x60] sm:$0xff]
    %v1911 = vld [vmem:[#allocation11 + $0x68] sm:$0xff]
    %v1912 = vld [vmem:[#allocation11 + $0x70] sm:$0xff]
    %v1913 = vld [vmem:[#allocation11 + $0x78] sm:$0xff]
    %v1914 = vpack.c.bf16 %v1896, %v1896
    %v1931 = vunpack.c.l.b16 %v1898
    %v1932 = vunpack.c.h.b16 %v1898
    %v1933 = vunpack.c.l.b16 %v1899
    %v1934 = vunpack.c.h.b16 %v1899
    %v1935 = vunpack.c.l.b16 %v1900
    %v1936 = vunpack.c.h.b16 %v1900
    %v1937 = vunpack.c.l.b16 %v1901
    %v1938 = vunpack.c.h.b16 %v1901
    %v1939 = vunpack.c.l.b16 %v1902
    %v1940 = vunpack.c.h.b16 %v1902
    %v1941 = vunpack.c.l.b16 %v1903
    %v1942 = vunpack.c.h.b16 %v1903
    %v1943 = vunpack.c.l.b16 %v1904
    %v1944 = vunpack.c.h.b16 %v1904
    %v1945 = vunpack.c.l.b16 %v1905
    %v1946 = vunpack.c.h.b16 %v1905
    %v1947 = vunpack.c.l.b16 %v1906
    %v1948 = vunpack.c.h.b16 %v1906
    %v1949 = vunpack.c.l.b16 %v1907
    %v1950 = vunpack.c.h.b16 %v1907
    %v1951 = vunpack.c.l.b16 %v1908
    %v1952 = vunpack.c.h.b16 %v1908
    %v1953 = vunpack.c.l.b16 %v1909
    %v1954 = vunpack.c.h.b16 %v1909
    %v1955 = vunpack.c.l.b16 %v1910
    %v1956 = vunpack.c.h.b16 %v1910
    %v1957 = vunpack.c.l.b16 %v1911
    %v1958 = vunpack.c.h.b16 %v1911
    %v1959 = vunpack.c.l.b16 %v1912
    %v1960 = vunpack.c.h.b16 %v1912
    %v1961 = vunpack.c.l.b16 %v1913
    %v1962 = vunpack.c.h.b16 %v1913
    %v1963 = vpack.c.b16 %v1933, %v1931
    %v1964 = vpack.c.b16 %v1934, %v1932
    %v1965 = vpack.c.b16 %v1937, %v1935
    %v1966 = vpack.c.b16 %v1938, %v1936
    %v1967 = vpack.c.b16 %v1941, %v1939
    %v1968 = vpack.c.b16 %v1942, %v1940
    %v1969 = vpack.c.b16 %v1945, %v1943
    %v1970 = vpack.c.b16 %v1946, %v1944
    %v1971 = vpack.c.b16 %v1949, %v1947
    %v1972 = vpack.c.b16 %v1950, %v1948
    %v1973 = vpack.c.b16 %v1953, %v1951
    %v1974 = vpack.c.b16 %v1954, %v1952
    %v1975 = vpack.c.b16 %v1957, %v1955
    %v1976 = vpack.c.b16 %v1958, %v1956
    %v1977 = vpack.c.b16 %v1961, %v1959
    %v1978 = vpack.c.b16 %v1962, %v1960
    %1995 = vmatprep.subr.bf16.mxu0 %v1964
    %1996 = vmatpush1.bf16.msra.mxu0 %v1963
    %1997 = vmatprep.subr.bf16.mxu0 %v1966
    %1998 = vmatpush1.bf16.msra.mxu0 %v1965
    %1999 = vmatprep.subr.bf16.mxu0 %v1968
    %2000 = vmatpush1.bf16.msra.mxu0 %v1967
    %2001 = vmatprep.subr.bf16.mxu0 %v1970
    %2002 = vmatpush1.bf16.msra.mxu0 %v1969
    %2003 = vmatprep.subr.bf16.mxu0 %v1972
    %2004 = vmatpush1.bf16.msra.mxu0 %v1971
    %2005 = vmatprep.subr.bf16.mxu0 %v1974
    %2006 = vmatpush1.bf16.msra.mxu0 %v1973
    %2007 = vmatprep.subr.bf16.mxu0 %v1976
    %2008 = vmatpush1.bf16.msra.mxu0 %v1975
    %2009 = vmatprep.subr.bf16.mxu0 %v1978
    %2010 = vmatpush1.bf16.msra.mxu0 %v1977
    %2011 = vmatprep.subr.bf16.mxu0 0
    %2012 = vmatpush1.bf16.msra.mxu0 0
    %2013 = vmatprep.subr.bf16.mxu0 0
    %2014 = vmatpush1.bf16.msra.mxu0 0
    %2015 = vmatprep.subr.bf16.mxu0 0
    %2016 = vmatpush1.bf16.msra.mxu0 0
    %2017 = vmatprep.subr.bf16.mxu0 0
    %2018 = vmatpush1.bf16.msra.mxu0 0
    %2019 = vmatprep.subr.bf16.mxu0 0
    %2020 = vmatpush1.bf16.msra.mxu0 0
    %2021 = vmatprep.subr.bf16.mxu0 0
    %2022 = vmatpush1.bf16.msra.mxu0 0
    %2023 = vmatprep.subr.bf16.mxu0 0
    %2024 = vmatpush1.bf16.msra.mxu0 0
    %2025 = vmatprep.subr.bf16.mxu0 0
    %2026 = vmatpush1.bf16.msra.mxu0 0
    %2027 = vmatprep.mubr.bf16.mxu0 0
    %2028 = vmatmul.mubr.bf16.gmra.mrb[0].mxu0 %v1914
    %v2029 = vpop.f32.mrb[0].mxu0
    %v2030 = vadd.f32 0.0, %v2029
    %v2031 = vpop.f32.mrb[0].mxu0
    %v2032 = vadd.f32 0.0, %v2031
    %v2033 = vpop.f32.mrb[0].mxu0
    %v2034 = vpop.f32.mrb[0].mxu0
    %2035 = vdwg.mxu0
    %v2036 = vsel %vm365, %v2030, 0.0
    %v2037 = vrot.slane %v2036, 4
    %v2038 = vadd.f32 %v2036, %v2037
    %v2039 = vrot.slane %v2038, 2
    %v2040 = vadd.f32 %v2038, %v2039
    %v2041 = vrot.slane %v2040, 1
    %v2042 = vadd.f32 %v2040, %v2041
    %v2043 = vsel %vm365, %v2032, 0.0
    %v2044 = vrot.slane %v2043, 4
    %v2045 = vadd.f32 %v2043, %v2044
    %v2046 = vrot.slane %v2045, 2
    %v2047 = vadd.f32 %v2045, %v2046
    %v2048 = vrot.slane %v2047, 1
    %v2049 = vadd.f32 %v2047, %v2048
    %v2050 = vmul.f32 %v2042, %v422
    %v2051 = vmul.f32 %v2049, %v422
    %v2052 = vsub.f32 %v2030, %v2050
    %v2053 = vsub.f32 %v2032, %v2051
    %v2054 = vmul.f32 %v2052, %v2052
    %v2055 = vmul.f32 %v2053, %v2053
    %v2056 = vsel %vm365, %v2054, 0.0
    %v2057 = vrot.slane %v2056, 4
    %v2058 = vadd.f32 %v2056, %v2057
    %v2059 = vrot.slane %v2058, 2
    %v2060 = vadd.f32 %v2058, %v2059
    %v2061 = vrot.slane %v2060, 1
    %v2062 = vadd.f32 %v2060, %v2061
    %v2063 = vsel %vm365, %v2055, 0.0
    %v2064 = vrot.slane %v2063, 4
    %v2065 = vadd.f32 %v2063, %v2064
    %v2066 = vrot.slane %v2065, 2
    %v2067 = vadd.f32 %v2065, %v2066
    %v2068 = vrot.slane %v2067, 1
    %v2069 = vadd.f32 %v2067, %v2068
    %v2070 = vmul.f32 %v2062, %v422
    %v2071 = vmul.f32 %v2069, %v422
    %v2072 = vadd.f32 %v2070, 1e-05
    %v2073 = vadd.f32 %v2071, 1e-05
    %v2074 = vrsqrt.pop %v2072
    %v2075 = vrsqrt.pop %v2073
    %v2076 = vmul.f32 %v2052, %v2074
    %v2077 = vmul.f32 %v2053, %v2075
    %v2078 = vld [vmem:[%s9 + $0x16] sm:$0x3]
    %v2080 = vlaneseq
    %v2081 = vshrl.u32 %v2080, 7
    %v2082 = vsub.s32 0, %v2081
    %v2083 = vrot.slane %v2078, %v2082
    %v2084 = vlaneseq
    %v2085 = vshrl.u32 %v2084, 7
    %v2086 = vsub.s32 1, %v2085
    %v2087 = vrot.slane %v2078, %v2086
    %v2090 = vmul.f32 %v2076, %v2083
    %v2091 = vmul.f32 %v2077, %v2087
    %v2092 = vld [vmem:[%s9 + $0x18] sm:$0x3]
    %v2094 = vlaneseq
    %v2095 = vshrl.u32 %v2094, 7
    %v2096 = vsub.s32 0, %v2095
    %v2097 = vrot.slane %v2092, %v2096
    %v2098 = vlaneseq
    %v2099 = vshrl.u32 %v2098, 7
    %v2100 = vsub.s32 1, %v2099
    %v2101 = vrot.slane %v2092, %v2100
    %v2104 = vadd.f32 %v2090, %v2097
    %v2105 = vadd.f32 %v2091, %v2101
    %v2106 = vmax.f32 %v2104, 0.0
    %v2107 = vmax.f32 %v2105, 0.0
    %v2108 = vld [vmem:[#allocation13] sm:$0xf]
    %v2109 = vld [vmem:[#allocation13 + $0x4] sm:$0xf]
    %v2110 = vld [vmem:[#allocation13 + $0x8] sm:$0xf]
    %v2111 = vld [vmem:[#allocation13 + $0xc] sm:$0xf]
    %v2112 = vld [vmem:[#allocation13 + $0x10] sm:$0xf]
    %v2113 = vld [vmem:[#allocation13 + $0x14] sm:$0xf]
    %v2114 = vld [vmem:[#allocation13 + $0x18] sm:$0xf]
    %v2115 = vld [vmem:[#allocation13 + $0x1c] sm:$0xf]
    %v2116 = vld [vmem:[#allocation13 + $0x20] sm:$0xf]
    %v2117 = vld [vmem:[#allocation13 + $0x24] sm:$0xf]
    %v2118 = vld [vmem:[#allocation13 + $0x28] sm:$0xf]
    %v2119 = vld [vmem:[#allocation13 + $0x2c] sm:$0xf]
    %v2120 = vld [vmem:[#allocation13 + $0x30] sm:$0xf]
    %v2121 = vld [vmem:[#allocation13 + $0x34] sm:$0xf]
    %v2122 = vld [vmem:[#allocation13 + $0x38] sm:$0xf]
    %v2123 = vld [vmem:[#allocation13 + $0x3c] sm:$0xf]
    %v2124 = vld [vmem:[#allocation13 + $0x40] sm:$0xf]
    %v2125 = vld [vmem:[#allocation13 + $0x44] sm:$0xf]
    %v2126 = vld [vmem:[#allocation13 + $0x48] sm:$0xf]
    %v2127 = vld [vmem:[#allocation13 + $0x4c] sm:$0xf]
    %v2128 = vld [vmem:[#allocation13 + $0x50] sm:$0xf]
    %v2129 = vld [vmem:[#allocation13 + $0x54] sm:$0xf]
    %v2130 = vld [vmem:[#allocation13 + $0x58] sm:$0xf]
    %v2131 = vld [vmem:[#allocation13 + $0x5c] sm:$0xf]
    %v2132 = vld [vmem:[#allocation13 + $0x60] sm:$0xf]
    %v2133 = vld [vmem:[#allocation13 + $0x64] sm:$0xf]
    %v2134 = vld [vmem:[#allocation13 + $0x68] sm:$0xf]
    %v2135 = vld [vmem:[#allocation13 + $0x6c] sm:$0xf]
    %v2136 = vld [vmem:[#allocation13 + $0x70] sm:$0xf]
    %v2137 = vld [vmem:[#allocation13 + $0x74] sm:$0xf]
    %v2138 = vld [vmem:[#allocation13 + $0x78] sm:$0xf]
    %v2139 = vld [vmem:[#allocation13 + $0x7c] sm:$0xf]
    %v2140 = vpack.c.bf16 %v2106, %v2106
    %v2141 = vpack.c.bf16 %v2107, %v2107
    %v2174 = vunpack.c.l.b16 %v2108
    %v2175 = vunpack.c.l.b16 %v2109
    %v2176 = vunpack.c.l.b16 %v2110
    %v2177 = vunpack.c.l.b16 %v2111
    %v2178 = vunpack.c.l.b16 %v2112
    %v2179 = vunpack.c.l.b16 %v2113
    %v2180 = vunpack.c.l.b16 %v2114
    %v2181 = vunpack.c.l.b16 %v2115
    %v2182 = vunpack.c.l.b16 %v2116
    %v2183 = vunpack.c.l.b16 %v2117
    %v2184 = vunpack.c.l.b16 %v2118
    %v2185 = vunpack.c.l.b16 %v2119
    %v2186 = vunpack.c.l.b16 %v2120
    %v2187 = vunpack.c.l.b16 %v2121
    %v2188 = vunpack.c.l.b16 %v2122
    %v2189 = vunpack.c.l.b16 %v2123
    %v2190 = vunpack.c.l.b16 %v2124
    %v2191 = vunpack.c.l.b16 %v2125
    %v2192 = vunpack.c.l.b16 %v2126
    %v2193 = vunpack.c.l.b16 %v2127
    %v2194 = vunpack.c.l.b16 %v2128
    %v2195 = vunpack.c.l.b16 %v2129
    %v2196 = vunpack.c.l.b16 %v2130
    %v2197 = vunpack.c.l.b16 %v2131
    %v2198 = vunpack.c.l.b16 %v2132
    %v2199 = vunpack.c.l.b16 %v2133
    %v2200 = vunpack.c.l.b16 %v2134
    %v2201 = vunpack.c.l.b16 %v2135
    %v2202 = vunpack.c.l.b16 %v2136
    %v2203 = vunpack.c.l.b16 %v2137
    %v2204 = vunpack.c.l.b16 %v2138
    %v2205 = vunpack.c.l.b16 %v2139
    %v2206 = vpack.c.b16 %v2175, %v2174
    %v2207 = vpack.c.b16 %v2177, %v2176
    %v2208 = vpack.c.b16 %v2179, %v2178
    %v2209 = vpack.c.b16 %v2181, %v2180
    %v2210 = vpack.c.b16 %v2183, %v2182
    %v2211 = vpack.c.b16 %v2185, %v2184
    %v2212 = vpack.c.b16 %v2187, %v2186
    %v2213 = vpack.c.b16 %v2189, %v2188
    %v2214 = vpack.c.b16 %v2191, %v2190
    %v2215 = vpack.c.b16 %v2193, %v2192
    %v2216 = vpack.c.b16 %v2195, %v2194
    %v2217 = vpack.c.b16 %v2197, %v2196
    %v2218 = vpack.c.b16 %v2199, %v2198
    %v2219 = vpack.c.b16 %v2201, %v2200
    %v2220 = vpack.c.b16 %v2203, %v2202
    %v2221 = vpack.c.b16 %v2205, %v2204
    %2238 = vmatprep.subr.bf16.mxu0 0
    %2239 = vmatpush1.bf16.msra.mxu0 %v2206
    %2240 = vmatprep.subr.bf16.mxu0 0
    %2241 = vmatpush1.bf16.msra.mxu0 %v2207
    %2242 = vmatprep.subr.bf16.mxu0 0
    %2243 = vmatpush1.bf16.msra.mxu0 %v2208
    %2244 = vmatprep.subr.bf16.mxu0 0
    %2245 = vmatpush1.bf16.msra.mxu0 %v2209
    %2246 = vmatprep.subr.bf16.mxu0 0
    %2247 = vmatpush1.bf16.msra.mxu0 %v2210
    %2248 = vmatprep.subr.bf16.mxu0 0
    %2249 = vmatpush1.bf16.msra.mxu0 %v2211
    %2250 = vmatprep.subr.bf16.mxu0 0
    %2251 = vmatpush1.bf16.msra.mxu0 %v2212
    %2252 = vmatprep.subr.bf16.mxu0 0
    %2253 = vmatpush1.bf16.msra.mxu0 %v2213
    %2254 = vmatprep.subr.bf16.mxu0 0
    %2255 = vmatpush1.bf16.msra.mxu0 %v2214
    %2256 = vmatprep.subr.bf16.mxu0 0
    %2257 = vmatpush1.bf16.msra.mxu0 %v2215
    %2258 = vmatprep.subr.bf16.mxu0 0
    %2259 = vmatpush1.bf16.msra.mxu0 %v2216
    %2260 = vmatprep.subr.bf16.mxu0 0
    %2261 = vmatpush1.bf16.msra.mxu0 %v2217
    %2262 = vmatprep.subr.bf16.mxu0 0
    %2263 = vmatpush1.bf16.msra.mxu0 %v2218
    %2264 = vmatprep.subr.bf16.mxu0 0
    %2265 = vmatpush1.bf16.msra.mxu0 %v2219
    %2266 = vmatprep.subr.bf16.mxu0 0
    %2267 = vmatpush1.bf16.msra.mxu0 %v2220
    %2268 = vmatprep.subr.bf16.mxu0 0
    %2269 = vmatpush1.bf16.msra.mxu0 %v2221
    %2270 = vmatprep.mubr.bf16.mxu0 %v2141
    %2271 = vmatmul.mubr.bf16.gmra.mrb[0].mxu0 %v2140
    %v2272 = vpop.f32.mrb[0].mxu0
    %v2273 = vadd.f32 0.0, %v2272
    %v2274 = vpop.f32.mrb[0].mxu0
    %v2275 = vpop.f32.mrb[0].mxu0
    %v2276 = vpop.f32.mrb[0].mxu0
    %2277 = vdwg.mxu0
    %v2278 = vsel %vm365, %v2273, 0.0
    %v2279 = vrot.slane %v2278, 4
    %v2280 = vadd.f32 %v2278, %v2279
    %v2281 = vrot.slane %v2280, 2
    %v2282 = vadd.f32 %v2280, %v2281
    %v2283 = vrot.slane %v2282, 1
    %v2284 = vadd.f32 %v2282, %v2283
    %v2285 = vmul.f32 %v2284, %v422
    %v2286 = vsub.f32 %v2273, %v2285
    %v2287 = vmul.f32 %v2286, %v2286
    %v2288 = vsel %vm365, %v2287, 0.0
    %v2289 = vrot.slane %v2288, 4
    %v2290 = vadd.f32 %v2288, %v2289
    %v2291 = vrot.slane %v2290, 2
    %v2292 = vadd.f32 %v2290, %v2291
    %v2293 = vrot.slane %v2292, 1
    %v2294 = vadd.f32 %v2292, %v2293
    %v2295 = vmul.f32 %v2294, %v422
    %v2296 = vadd.f32 %v2295, 1e-05
    %v2297 = vrsqrt.pop %v2296
    %v2298 = vmul.f32 %v2286, %v2297
    %v2299 = vld [vmem:[%s9 + $0x1a] sm:$0x1]
    %v2301 = vlaneseq
    %v2302 = vshrl.u32 %v2301, 7
    %v2303 = vsub.s32 0, %v2302
    %v2304 = vrot.slane %v2299, %v2303
    %v2306 = vmul.f32 %v2298, %v2304
    %v2307 = vld [vmem:[%s9 + $0x1b] sm:$0x1]
    %v2309 = vlaneseq
    %v2310 = vshrl.u32 %v2309, 7
    %v2311 = vsub.s32 0, %v2310
    %v2312 = vrot.slane %v2307, %v2311
    %v2314 = vadd.f32 %v2306, %v2312
    %v2315 = vmax.f32 %v2314, 0.0
    %v2316 = vld [vmem:[#allocation14] sm:$0xf]
    %v2317 = vld [vmem:[#allocation14 + $0x4] sm:$0xf]
    %v2318 = vld [vmem:[#allocation14 + $0x8] sm:$0xf]
    %v2319 = vld [vmem:[#allocation14 + $0xc] sm:$0xf]
    %v2320 = vld [vmem:[#allocation14 + $0x10] sm:$0xf]
    %v2321 = vld [vmem:[#allocation14 + $0x14] sm:$0xf]
    %v2322 = vld [vmem:[#allocation14 + $0x18] sm:$0xf]
    %v2323 = vld [vmem:[#allocation14 + $0x1c] sm:$0xf]
    %v2324 = vld [vmem:[#allocation14 + $0x20] sm:$0xf]
    %v2325 = vld [vmem:[#allocation14 + $0x24] sm:$0xf]
    %v2326 = vld [vmem:[#allocation14 + $0x28] sm:$0xf]
    %v2327 = vld [vmem:[#allocation14 + $0x2c] sm:$0xf]
    %v2328 = vld [vmem:[#allocation14 + $0x30] sm:$0xf]
    %v2329 = vld [vmem:[#allocation14 + $0x34] sm:$0xf]
    %v2330 = vld [vmem:[#allocation14 + $0x38] sm:$0xf]
    %v2331 = vld [vmem:[#allocation14 + $0x3c] sm:$0xf]
    %v2332 = vpack.c.bf16 %v2315, %v2315
    %v2349 = vunpack.c.l.b16 %v2316
    %v2350 = vunpack.c.l.b16 %v2317
    %v2351 = vunpack.c.l.b16 %v2318
    %v2352 = vunpack.c.l.b16 %v2319
    %v2353 = vunpack.c.l.b16 %v2320
    %v2354 = vunpack.c.l.b16 %v2321
    %v2355 = vunpack.c.l.b16 %v2322
    %v2356 = vunpack.c.l.b16 %v2323
    %v2357 = vunpack.c.l.b16 %v2324
    %v2358 = vunpack.c.l.b16 %v2325
    %v2359 = vunpack.c.l.b16 %v2326
    %v2360 = vunpack.c.l.b16 %v2327
    %v2361 = vunpack.c.l.b16 %v2328
    %v2362 = vunpack.c.l.b16 %v2329
    %v2363 = vunpack.c.l.b16 %v2330
    %v2364 = vunpack.c.l.b16 %v2331
    %v2365 = vpack.c.b16 %v2350, %v2349
    %v2366 = vpack.c.b16 %v2352, %v2351
    %v2367 = vpack.c.b16 %v2354, %v2353
    %v2368 = vpack.c.b16 %v2356, %v2355
    %v2369 = vpack.c.b16 %v2358, %v2357
    %v2370 = vpack.c.b16 %v2360, %v2359
    %v2371 = vpack.c.b16 %v2362, %v2361
    %v2372 = vpack.c.b16 %v2364, %v2363
    %2381 = vmatprep.subr.bf16.mxu0 0
    %2382 = vmatpush1.bf16.msra.mxu0 %v2365
    %2383 = vmatprep.subr.bf16.mxu0 0
    %2384 = vmatpush1.bf16.msra.mxu0 %v2366
    %2385 = vmatprep.subr.bf16.mxu0 0
    %2386 = vmatpush1.bf16.msra.mxu0 %v2367
    %2387 = vmatprep.subr.bf16.mxu0 0
    %2388 = vmatpush1.bf16.msra.mxu0 %v2368
    %2389 = vmatprep.subr.bf16.mxu0 0
    %2390 = vmatpush1.bf16.msra.mxu0 %v2369
    %2391 = vmatprep.subr.bf16.mxu0 0
    %2392 = vmatpush1.bf16.msra.mxu0 %v2370
    %2393 = vmatprep.subr.bf16.mxu0 0
    %2394 = vmatpush1.bf16.msra.mxu0 %v2371
    %2395 = vmatprep.subr.bf16.mxu0 0
    %2396 = vmatpush1.bf16.msra.mxu0 %v2372
    %2397 = vmatprep.subr.bf16.mxu0 0
    %2398 = vmatpush1.bf16.msra.mxu0 0
    %2399 = vmatprep.subr.bf16.mxu0 0
    %2400 = vmatpush1.bf16.msra.mxu0 0
    %2401 = vmatprep.subr.bf16.mxu0 0
    %2402 = vmatpush1.bf16.msra.mxu0 0
    %2403 = vmatprep.subr.bf16.mxu0 0
    %2404 = vmatpush1.bf16.msra.mxu0 0
    %2405 = vmatprep.subr.bf16.mxu0 0
    %2406 = vmatpush1.bf16.msra.mxu0 0
    %2407 = vmatprep.subr.bf16.mxu0 0
    %2408 = vmatpush1.bf16.msra.mxu0 0
    %2409 = vmatprep.subr.bf16.mxu0 0
    %2410 = vmatpush1.bf16.msra.mxu0 0
    %2411 = vmatprep.subr.bf16.mxu0 0
    %2412 = vmatpush1.bf16.msra.mxu0 0
    %2413 = vmatprep.mubr.bf16.mxu0 0
    %2414 = vmatmul.mubr.bf16.gmra.mrb[0].mxu0 %v2332
    %v2415 = vpop.f32.mrb[0].mxu0
    %v2416 = vadd.f32 0.0, %v2415
    %v2417 = vpop.f32.mrb[0].mxu0
    %v2418 = vpop.f32.mrb[0].mxu0
    %v2419 = vpop.f32.mrb[0].mxu0
    %2420 = vdwg.mxu0
    %v2421 = vsel %vm365, %v2416, 0.0
    %v2422 = vrot.slane %v2421, 4
    %v2423 = vadd.f32 %v2421, %v2422
    %v2424 = vrot.slane %v2423, 2
    %v2425 = vadd.f32 %v2423, %v2424
    %v2426 = vrot.slane %v2425, 1
    %v2427 = vadd.f32 %v2425, %v2426
    %v2428 = vmul.f32 %v2427, %v422
    %v2429 = vsub.f32 %v2416, %v2428
    %v2430 = vmul.f32 %v2429, %v2429
    %v2431 = vsel %vm365, %v2430, 0.0
    %v2432 = vrot.slane %v2431, 4
    %v2433 = vadd.f32 %v2431, %v2432
    %v2434 = vrot.slane %v2433, 2
    %v2435 = vadd.f32 %v2433, %v2434
    %v2436 = vrot.slane %v2435, 1
    %v2437 = vadd.f32 %v2435, %v2436
    %v2438 = vmul.f32 %v2437, %v422
    %v2439 = vadd.f32 %v2438, 1e-05
    %v2440 = vrsqrt.pop %v2439
    %v2441 = vmul.f32 %v2429, %v2440
    %v2442 = vld [vmem:[%s9 + $0x1c] sm:$0x1]
    %v2444 = vlaneseq
    %v2445 = vshrl.u32 %v2444, 7
    %v2446 = vsub.s32 0, %v2445
    %v2447 = vrot.slane %v2442, %v2446
    %v2449 = vmul.f32 %v2441, %v2447
    %v2450 = vld [vmem:[%s9 + $0x1d] sm:$0x1]
    %v2452 = vlaneseq
    %v2453 = vshrl.u32 %v2452, 7
    %v2454 = vsub.s32 0, %v2453
    %v2455 = vrot.slane %v2450, %v2454
    %v2457 = vadd.f32 %v2449, %v2455
    %v2458 = vld [vmem:[%s9 + $0x1e] sm:$0x1]
    %v2460 = vlaneseq
    %v2461 = vshrl.u32 %v2460, 7
    %v2462 = vsub.s32 0, %v2461
    %v2463 = vrot.slane %v2458, %v2462
    %v2465 = vadd.f32 %v2457, %v2463
    %v2466 = vsel %vm365, %v2465, -inf
    %2467 = vmax.xlane.f32.xlu0 %v2466
    %v2468 = vpop.xlane.xlu0 %2467
    %v2469 = vsub.f32 %v2465, %v2468
    %v2470 = vmul.f32 %v2469, 1.442695
    %v2471 = vpow.pop %v2470
    %v2472 = vsel %vm365, %v2471, 0.0
    %2473 = vadd.xlane.f32.xlu0 %v2472
    %v2474 = vpop.xlane.xlu0 %2473
    %v2475 = vrcp.pop %v2474
    %v2476 = vmul.f32 %v2471, %v2475
    %2477 = vst [vmem:[#allocation16] sm:$0x3] %v2476
    // Predicated region
    $region74: #{tpu_custom_call.1} parent=1 // pred_check
      _
    $region75: #{tpu_custom_call.1} parent=1 // pred_check_branch
      %2479 = sbr.rel (0) target = $region77
    $region76: #{tpu_custom_call.1} parent=1 // pred_region
      %s2481 = ssub.s32 32, 32
      %2482 = vsyncadd [#allocation4], %s2481
      %s2484 = sshll.u32 [#allocation16], 4
      %s2485 = int_to_ptr.vmem [resolvable:$true] %s2484
      %2487 = dma.vmem_to_hbm [thread:$0]  %s2485, 32, %s10, [#allocation4]
    $region77: #{tpu_custom_call.1} parent=1 // pred_fallthru
      _
    // Predicated region
    $region78: #{tpu_custom_call.1} parent=1 // pred_check
      _
    $region79: #{tpu_custom_call.1} parent=1 // pred_check_branch
      %2489 = sbr.rel (0) target = $region81
    $region80: #{tpu_custom_call.1} parent=1 // pred_region
      %s2491 = ssub.s32 32, 32
      %2492 = vsyncadd [#allocation18], %s2491
      %s2494 = sshll.u32 [#allocation17], 4
      %s2495 = int_to_ptr.vmem [resolvable:$true] %s2494
      %2497 = dma.vmem_to_hbm [thread:$0]  %s2495, 32, %s11, [#allocation18]
    $region81: #{tpu_custom_call.1} parent=1 // pred_fallthru
      _
    // Predicated region
    $region82: #{tpu_custom_call.1} parent=1 // pred_check
      _
    $region83: #{tpu_custom_call.1} parent=1 // pred_check_branch
      %2499 = sbr.rel (0) target = $region85
    $region84: #{tpu_custom_call.1} parent=1 // pred_region
      %2500 = dma.done [#allocation4], 32
    $region85: #{tpu_custom_call.1} parent=1 // pred_fallthru
      _
    // Predicated region
    $region86: #{tpu_custom_call.1} parent=1 // pred_check
      _
    $region87: #{tpu_custom_call.1} parent=1 // pred_check_branch
      %2502 = sbr.rel (0) target = $region89
    $region88: #{tpu_custom_call.1} parent=1 // pred_region
      %2503 = dma.done [#allocation18], 32
    $region89: #{tpu_custom_call.1} parent=1 // pred_fallthru
      _
    %2504 = vsyncpa [#allocation3], 1
    %2505 = vsyncpa [#allocation6], 1
    %2506 = vsyncpa [#allocation9], 1
    %2507 = vsyncpa [#allocation12], 1
    %2508 = vsyncpa [#allocation15], 1
    %2509 = vsyncpa [#allocation4], 1
    %2510 = vsyncpa [#allocation18], 1

</llo_original>
